<compile_context>
chip_gen: v5e
topology: v5e:2x2
jax: 0.10.0
libtpu: 0.0.40
codegen_flags: <defaults>
</compile_context>

<pallas_src>
import functools

import jax
import jax.numpy as jnp
from jax import lax
from jax.experimental import pallas as pl
from jax.experimental.pallas import tpu as pltpu


def _round_up(x, m):
    return ((x + m - 1) // m) * m


def _conv_block_kernel(x_ref, w1_ref, b1_ref, w2_ref, b2_ref, o_ref,
                       pad1_ref, pad2_ref, col1_ref, col2_ref,
                       *, H, W, B, head):
    # x_ref:    (B, Cin, H*W)    B images, channel-first, spatial flattened (lanes)
    # w1_ref:   (Cout, 9*Cin)    im2col-packed weights (tap-major K), bf16 or f32
    # w2_ref:   (Cout, 9*Cout)
    # b*_ref:   (Cout, 1)        f32
    # o_ref:    (B, Cout, H*W)
    # pad*_ref: (C, L) f32 flat padded image; zero head/tail = vertical padding
    # col*_ref: (9*C, B*H*W)     im2col scratch in the MXU operand dtype
    HW = H * W
    Cin = pad1_ref.shape[0]
    Cout = pad2_ref.shape[0]

    # One-time clear of the zero halos; the middle HW stripe is fully
    # overwritten every image and scratch persists across grid iterations.
    @pl.when(pl.program_id(0) == 0)
    def _():
        pad1_ref[:, :head] = jnp.zeros((Cin, head), jnp.float32)
        pad1_ref[:, head + HW:] = jnp.zeros(
            (Cin, pad1_ref.shape[1] - head - HW), jnp.float32)
        pad2_ref[:, :head] = jnp.zeros((Cout, head), jnp.float32)
        pad2_ref[:, head + HW:] = jnp.zeros(
            (Cout, pad2_ref.shape[1] - head - HW), jnp.float32)

    # Wrap masks (grid-invariant; cheap iota+cmp).  In the flattened layout the
    # dx=0 / dx=2 taps at x==0 / x==W-1 wrap into the neighbouring row.
    col_idx = lax.broadcasted_iota(jnp.int32, (1, HW), 1) % W
    not_left = col_idx != 0            # kills dx=0 taps at x == 0
    not_right = col_idx != (W - 1)     # kills dx=2 taps at x == W-1

    def build_im2col(pad_ref, col_ref, b):
        # 9 statically shifted lane slices of the padded flat image -> im2col.
        C = pad_ref.shape[0]
        for dy in range(3):
            for dx in range(3):
                t = 3 * dy + dx
                off = head - (W + 1) + dy * W + dx          # static offset
                s = pad_ref[:, off:off + HW]                # (C, HW) f32
                if dx == 0:
                    s = jnp.where(not_left, s, 0.0)
                elif dx == 2:
                    s = jnp.where(not_right, s, 0.0)
                col_ref[t * C:(t + 1) * C, b * HW:(b + 1) * HW] = (
                    s.astype(col_ref.dtype))

    # ---- conv1: im2col over the B-image block, then ONE matmul + bias + ReLU
    for b in range(B):
        pad1_ref[:, head:head + HW] = x_ref[b].astype(jnp.float32)
        build_im2col(pad1_ref, col1_ref, b)
    y1 = jnp.dot(w1_ref[...], col1_ref[...], preferred_element_type=jnp.float32)
    act1 = jnp.maximum(y1 + b1_ref[...], 0.0)               # (Cout, B*HW) f32

    # ---- conv2: intermediate never leaves VMEM -------------------------------
    for b in range(B):
        pad2_ref[:, head:head + HW] = act1[:, b * HW:(b + 1) * HW]
        build_im2col(pad2_ref, col2_ref, b)
    y2 = jnp.dot(w2_ref[...], col2_ref[...], preferred_element_type=jnp.float32)
    act2 = jnp.maximum(y2 + b2_ref[...], 0.0)                # (Cout, B*HW) f32

    for b in range(B):
        o_ref[b] = act2[:, b * HW:(b + 1) * HW].astype(o_ref.dtype)


def prepack_conv_block_params(params, mxu_dtype=jnp.bfloat16):
    """One-time weight repack (call outside the per-step forward).

    Packs (Cout, Cin, 3, 3) -> (Cout, 9*Cin) with K ordered tap-major
    (t = 3*dy + dx, then input channel), matching the kernel's im2col rows,
    and casts the MXU operands to `mxu_dtype` (bf16 by default; use f32 for
    bit-exactness vs an f32 reference).
    """
    w1, b1, w2, b2 = params
    Cout, Cin = w1.shape[0], w1.shape[1]
    w1_p = jnp.transpose(w1, (0, 2, 3, 1)).reshape(Cout, 9 * Cin).astype(mxu_dtype)
    w2_p = jnp.transpose(w2, (0, 2, 3, 1)).reshape(Cout, 9 * Cout).astype(mxu_dtype)
    b1_p = b1.reshape(Cout, 1).astype(jnp.float32)
    b2_p = b2.reshape(Cout, 1).astype(jnp.float32)
    return w1_p, b1_p, w2_p, b2_p


def conv_block(x_nchw, packed_params, *, block_batch=None):
    """ConvBlock forward: NCHW in, NCHW out (PyTorch convention)."""
    w1_p, b1_p, w2_p, b2_p = packed_params
    N, Cin, H, W = x_nchw.shape
    Cout = w1_p.shape[0]
    HW = H * W
    head = _round_up(W + 1, 128)             # lane-aligned zero head
    L = head + _round_up(HW + W + 1, 128)    # flat padded scratch length

    if block_batch is None:                  # biggest divisor of N that is <= 8
        block_batch = next(b for b in range(min(N, 8), 0, -1) if N % b == 0)
    B = block_batch
    assert N % B == 0
    mxu_dtype = w1_p.dtype

    # Free, contiguous reshape (no HBM pass over x, no transpose).
    x_flat = x_nchw.reshape(N, Cin, HW)

    flops = 2 * 9 * HW * (Cout * Cin + Cout * Cout) * N
    bytes_accessed = int(
        x_flat.size * x_flat.dtype.itemsize
        + w1_p.size * w1_p.dtype.itemsize + w2_p.size * w2_p.dtype.itemsize
        + b1_p.size * 4 + b2_p.size * 4
        + N * Cout * HW * x_nchw.dtype.itemsize)

    kernel = functools.partial(_conv_block_kernel, H=H, W=W, B=B, head=head)
    out_flat = pl.pallas_call(
        kernel,
        out_shape=jax.ShapeDtypeStruct((N, Cout, HW), x_nchw.dtype),
        grid=(N // B,),
        in_specs=[
            pl.BlockSpec((B, Cin, HW), lambda n: (n, 0, 0)),
            pl.BlockSpec((Cout, 9 * Cin), lambda n: (0, 0)),
            pl.BlockSpec((Cout, 1), lambda n: (0, 0)),
            pl.BlockSpec((Cout, 9 * Cout), lambda n: (0, 0)),
            pl.BlockSpec((Cout, 1), lambda n: (0, 0)),
        ],
        out_specs=pl.BlockSpec((B, Cout, HW), lambda n: (n, 0, 0)),
        scratch_shapes=[
            pltpu.VMEM((Cin, L), jnp.float32),           # padded flat input
            pltpu.VMEM((Cout, L), jnp.float32),          # padded flat act1
            pltpu.VMEM((9 * Cin, B * HW), mxu_dtype),    # im2col for conv1
            pltpu.VMEM((9 * Cout, B * HW), mxu_dtype),   # im2col for conv2
        ],
        compiler_params=pltpu.CompilerParams(
            dimension_semantics=("parallel",)),
        cost_estimate=pl.CostEstimate(
            flops=flops, transcendentals=0, bytes_accessed=bytes_accessed),
    )(x_flat, w1_p, b1_p, w2_p, b2_p)

    return out_flat.reshape(N, Cout, H, W)   # free, contiguous


def init_conv_block_params(key, in_channels, out_channels):
    """Deterministic init mimicking PyTorch Conv2d default (uniform +-1/sqrt(fan_in))."""
    k1, k2, k3, k4 = jax.random.split(key, 4)
    lim1 = 1.0 / (in_channels * 9) ** 0.5
    w1 = jax.random.uniform(k1, (out_channels, in_channels, 3, 3), jnp.float32, -lim1, lim1)
    b1 = jax.random.uniform(k2, (out_channels,), jnp.float32, -lim1, lim1)
    lim2 = 1.0 / (out_channels * 9) ** 0.5
    w2 = jax.random.uniform(k3, (out_channels, out_channels, 3, 3), jnp.float32, -lim2, lim2)
    b2 = jax.random.uniform(k4, (out_channels,), jnp.float32, -lim2, lim2)
    return w1, b1, w2, b2


def _ref_conv_relu_nchw(x, w_oihw, b):
    # Pure-JAX reference (XLA conv) for correctness check.
    y = lax.conv_general_dilated(
        x, w_oihw, window_strides=(1, 1), padding=((1, 1), (1, 1)),
        dimension_numbers=("NCHW", "OIHW", "NCHW"))
    return jnp.maximum(y + b[None, :, None, None], 0.0)


if __name__ == "__main__":
    key = jax.random.PRNGKey(0)
    k_x, k_p = jax.random.split(key)

    N, C_IN, C_OUT, H, W = 2, 4, 8, 16, 16
    x = jax.random.normal(k_x, (N, C_IN, H, W), jnp.float32)
    params = init_conv_block_params(k_p, C_IN, C_OUT)

    ref = _ref_conv_relu_nchw(_ref_conv_relu_nchw(x, params[0], params[1]),
                              params[2], params[3])

    # 1) Algorithmic exactness check: f32 MXU operands vs the f32 XLA reference.
    packed_f32 = prepack_conv_block_params(params, mxu_dtype=jnp.float32)
    out_f32 = jax.block_until_ready(jax.jit(conv_block)(x, packed_f32))
    assert out_f32.shape == (N, C_OUT, H, W)
    assert jnp.allclose(out_f32, ref, atol=1e-4, rtol=1e-4), \
        "f32 path mismatch vs XLA reference"

    # 2) Performance path: bf16 MXU operands, f32 accumulation & VPU math.
    packed_bf16 = prepack_conv_block_params(params, mxu_dtype=jnp.bfloat16)
    out_bf16 = jax.block_until_ready(jax.jit(conv_block)(x, packed_bf16))
    assert out_bf16.shape == (N, C_OUT, H, W)
    assert jnp.allclose(out_bf16, ref, atol=5e-2, rtol=5e-2), \
        "bf16 path mismatch vs XLA reference (beyond bf16 tolerance)"

    print("KERNEL_OK")
</pallas_src>

<mosaic_0001>
module attributes {stable_mosaic.version = 11 : i64} {
  func.func @_conv_block_kernel(%arg0: i32, %arg1: memref<2x4x256xf32, #tpu.memory_space<vmem>>, %arg2: memref<8x36xf32, #tpu.memory_space<vmem>>, %arg3: memref<8x1xf32, #tpu.memory_space<vmem>>, %arg4: memref<8x72xf32, #tpu.memory_space<vmem>>, %arg5: memref<8x1xf32, #tpu.memory_space<vmem>>, %arg6: memref<2x8x256xf32, #tpu.memory_space<vmem>>, %arg7: memref<4x512xf32, #tpu.memory_space<vmem>>, %arg8: memref<8x512xf32, #tpu.memory_space<vmem>>, %arg9: memref<36x512xf32, #tpu.memory_space<vmem>>, %arg10: memref<72x512xf32, #tpu.memory_space<vmem>>) attributes {dimension_semantics = [#tpu.dimension_semantics<parallel>], iteration_bounds = array<i64: 1>, scalar_prefetch = 0 : i64, scratch_operands = 4 : i64, tpu.core_type = #tpu.core_type<tc>, window_params = [{transform_indices = @transform_0, window_bounds = array<i64: 2, 4, 256>}, {pipeline_mode = #tpu.pipeline_mode<synchronous>, transform_indices = @transform_1, window_bounds = array<i64: 8, 36>}, {pipeline_mode = #tpu.pipeline_mode<synchronous>, transform_indices = @transform_2, window_bounds = array<i64: 8, 1>}, {pipeline_mode = #tpu.pipeline_mode<synchronous>, transform_indices = @transform_3, window_bounds = array<i64: 8, 72>}, {pipeline_mode = #tpu.pipeline_mode<synchronous>, transform_indices = @transform_4, window_bounds = array<i64: 8, 1>}, {transform_indices = @transform_5, window_bounds = array<i64: 2, 8, 256>}]} {
    %c0_i32 = arith.constant 0 : i32
    %0 = arith.cmpi eq, %arg0, %c0_i32 : i32
    %1 = arith.extui %0 : i1 to i32
    %c0_i32_0 = arith.constant 0 : i32
    %2 = arith.cmpi ne, %1, %c0_i32_0 : i32
    scf.if %2 {
      %cst_185 = arith.constant 0.000000e+00 : f32
      %226 = vector.broadcast %cst_185 : f32 to vector<4x128xf32>
      %c0_186 = arith.constant 0 : index
      %c0_187 = arith.constant 0 : index
      %227 = vector.load %arg7[%c0_186, %c0_187] : memref<4x512xf32, #tpu.memory_space<vmem>>, vector<4x128xf32>
      tpu.vector_store %arg7[%c0_186, %c0_187], %226 {strides = array<i32>} : memref<4x512xf32, #tpu.memory_space<vmem>>, vector<4x128xf32>,
      %cst_188 = arith.constant 0.000000e+00 : f32
      %228 = vector.broadcast %cst_188 : f32 to vector<4x128xf32>
      %c0_189 = arith.constant 0 : index
      %c384 = arith.constant 384 : index
      %229 = vector.load %arg7[%c0_189, %c384] : memref<4x512xf32, #tpu.memory_space<vmem>>, vector<4x128xf32>
      tpu.vector_store %arg7[%c0_189, %c384], %228 {strides = array<i32>} : memref<4x512xf32, #tpu.memory_space<vmem>>, vector<4x128xf32>,
      %cst_190 = arith.constant 0.000000e+00 : f32
      %230 = vector.broadcast %cst_190 : f32 to vector<8x128xf32>
      %c0_191 = arith.constant 0 : index
      %c0_192 = arith.constant 0 : index
      %231 = vector.load %arg8[%c0_191, %c0_192] : memref<8x512xf32, #tpu.memory_space<vmem>>, vector<8x128xf32>
      tpu.vector_store %arg8[%c0_191, %c0_192], %230 {strides = array<i32>} : memref<8x512xf32, #tpu.memory_space<vmem>>, vector<8x128xf32>,
      %cst_193 = arith.constant 0.000000e+00 : f32
      %232 = vector.broadcast %cst_193 : f32 to vector<8x128xf32>
      %c0_194 = arith.constant 0 : index
      %c384_195 = arith.constant 384 : index
      %233 = vector.load %arg8[%c0_194, %c384_195] : memref<8x512xf32, #tpu.memory_space<vmem>>, vector<8x128xf32>
      tpu.vector_store %arg8[%c0_194, %c384_195], %232 {strides = array<i32>} : memref<8x512xf32, #tpu.memory_space<vmem>>, vector<8x128xf32>,
    } else {
    }
    %3 = tpu.iota {dimensions = array<i32: 1>} : vector<1x256xi32>
    %c16_i32 = arith.constant 16 : i32
    %c0_i32_1 = arith.constant 0 : i32
    %4 = arith.cmpi eq, %c16_i32, %c0_i32_1 : i32
    %c1_i32 = arith.constant 1 : i32
    %5 = arith.select %4, %c1_i32, %c16_i32 : i32
    %6 = vector.broadcast %5 : i32 to vector<1x256xi32>
    %7 = arith.remsi %3, %6 : vector<1x256xi32>
    %c0_i32_2 = arith.constant 0 : i32
    %8 = vector.broadcast %c0_i32_2 : i32 to vector<1x256xi32>
    %9 = arith.cmpi ne, %7, %8 : vector<1x256xi32>
    %c0_i32_3 = arith.constant 0 : i32
    %10 = vector.broadcast %c0_i32_3 : i32 to vector<1x256xi32>
    %11 = arith.cmpi slt, %7, %10 : vector<1x256xi32>
    %c0_i32_4 = arith.constant 0 : i32
    %12 = arith.cmpi slt, %5, %c0_i32_4 : i32
    %13 = vector.broadcast %12 : i1 to vector<1x256xi1>
    %14 = vector.broadcast %13 : vector<1x256xi1> to vector<1x256xi1>
    %15 = arith.xori %11, %14 : vector<1x256xi1>
    %16 = arith.andi %15, %9 : vector<1x256xi1>
    %17 = vector.broadcast %5 : i32 to vector<1x256xi32>
    %18 = arith.addi %7, %17 : vector<1x256xi32>
    %19 = arith.select %16, %18, %7 : vector<1x256xi1>, vector<1x256xi32>
    %c0_i32_5 = arith.constant 0 : i32
    %20 = vector.broadcast %c0_i32_5 : i32 to vector<1x256xi32>
    %21 = arith.cmpi ne, %19, %20 : vector<1x256xi32>
    %c15_i32 = arith.constant 15 : i32
    %22 = vector.broadcast %c15_i32 : i32 to vector<1x256xi32>
    %23 = arith.cmpi ne, %19, %22 : vector<1x256xi32>
    %c0 = arith.constant 0 : index
    %c0_6 = arith.constant 0 : index
    %c0_7 = arith.constant 0 : index
    %24 = vector.load %arg1[%c0, %c0_6, %c0_7] : memref<2x4x256xf32, #tpu.memory_space<vmem>>, vector<1x4x256xf32>
    %25 = vector.shape_cast %24 : vector<1x4x256xf32> to vector<4x256xf32>
    %c0_8 = arith.constant 0 : index
    %c128 = arith.constant 128 : index
    %26 = vector.load %arg7[%c0_8, %c128] : memref<4x512xf32, #tpu.memory_space<vmem>>, vector<4x256xf32>
    tpu.vector_store %arg7[%c0_8, %c128], %25 {strides = array<i32>} : memref<4x512xf32, #tpu.memory_space<vmem>>, vector<4x256xf32>,
    %c0_9 = arith.constant 0 : index
    %c111 = arith.constant 111 : index
    %27 = vector.load %arg7[%c0_9, %c111] : memref<4x512xf32, #tpu.memory_space<vmem>>, vector<4x256xf32>
    %cst = arith.constant 0.000000e+00 : f32
    %28 = vector.shape_cast %21 : vector<1x256xi1> to vector<1x256xi1>
    %29 = vector.broadcast %28 : vector<1x256xi1> to vector<4x256xi1>
    %30 = vector.broadcast %cst : f32 to vector<4x256xf32>
    %31 = arith.select %29, %27, %30 : vector<4x256xi1>, vector<4x256xf32>
    %c0_10 = arith.constant 0 : index
    %c0_11 = arith.constant 0 : index
    %32 = vector.load %arg9[%c0_10, %c0_11] : memref<36x512xf32, #tpu.memory_space<vmem>>, vector<4x256xf32>
    tpu.vector_store %arg9[%c0_10, %c0_11], %31 {strides = array<i32>} : memref<36x512xf32, #tpu.memory_space<vmem>>, vector<4x256xf32>,
    %c0_12 = arith.constant 0 : index
    %c112 = arith.constant 112 : index
    %33 = vector.load %arg7[%c0_12, %c112] : memref<4x512xf32, #tpu.memory_space<vmem>>, vector<4x256xf32>
    %c4 = arith.constant 4 : index
    %c0_13 = arith.constant 0 : index
    %34 = vector.load %arg9[%c4, %c0_13] : memref<36x512xf32, #tpu.memory_space<vmem>>, vector<4x256xf32>
    tpu.vector_store %arg9[%c4, %c0_13], %33 {strides = array<i32>} : memref<36x512xf32, #tpu.memory_space<vmem>>, vector<4x256xf32>,
    %c0_14 = arith.constant 0 : index
    %c113 = arith.constant 113 : index
    %35 = vector.load %arg7[%c0_14, %c113] : memref<4x512xf32, #tpu.memory_space<vmem>>, vector<4x256xf32>
    %cst_15 = arith.constant 0.000000e+00 : f32
    %36 = vector.shape_cast %23 : vector<1x256xi1> to vector<1x256xi1>
    %37 = vector.broadcast %36 : vector<1x256xi1> to vector<4x256xi1>
    %38 = vector.broadcast %cst_15 : f32 to vector<4x256xf32>
    %39 = arith.select %37, %35, %38 : vector<4x256xi1>, vector<4x256xf32>
    %c8 = arith.constant 8 : index
    %c0_16 = arith.constant 0 : index
    %40 = vector.load %arg9[%c8, %c0_16] : memref<36x512xf32, #tpu.memory_space<vmem>>, vector<4x256xf32>
    tpu.vector_store %arg9[%c8, %c0_16], %39 {strides = array<i32>} : memref<36x512xf32, #tpu.memory_space<vmem>>, vector<4x256xf32>,
    %c0_17 = arith.constant 0 : index
    %c127 = arith.constant 127 : index
    %41 = vector.load %arg7[%c0_17, %c127] : memref<4x512xf32, #tpu.memory_space<vmem>>, vector<4x256xf32>
    %cst_18 = arith.constant 0.000000e+00 : f32
    %42 = vector.shape_cast %21 : vector<1x256xi1> to vector<1x256xi1>
    %43 = vector.broadcast %42 : vector<1x256xi1> to vector<4x256xi1>
    %44 = vector.broadcast %cst_18 : f32 to vector<4x256xf32>
    %45 = arith.select %43, %41, %44 : vector<4x256xi1>, vector<4x256xf32>
    %c12 = arith.constant 12 : index
    %c0_19 = arith.constant 0 : index
    %46 = vector.load %arg9[%c12, %c0_19] : memref<36x512xf32, #tpu.memory_space<vmem>>, vector<4x256xf32>
    tpu.vector_store %arg9[%c12, %c0_19], %45 {strides = array<i32>} : memref<36x512xf32, #tpu.memory_space<vmem>>, vector<4x256xf32>,
    %c0_20 = arith.constant 0 : index
    %c128_21 = arith.constant 128 : index
    %47 = vector.load %arg7[%c0_20, %c128_21] : memref<4x512xf32, #tpu.memory_space<vmem>>, vector<4x256xf32>
    %c16 = arith.constant 16 : index
    %c0_22 = arith.constant 0 : index
    %48 = vector.load %arg9[%c16, %c0_22] : memref<36x512xf32, #tpu.memory_space<vmem>>, vector<4x256xf32>
    tpu.vector_store %arg9[%c16, %c0_22], %47 {strides = array<i32>} : memref<36x512xf32, #tpu.memory_space<vmem>>, vector<4x256xf32>,
    %c0_23 = arith.constant 0 : index
    %c129 = arith.constant 129 : index
    %49 = vector.load %arg7[%c0_23, %c129] : memref<4x512xf32, #tpu.memory_space<vmem>>, vector<4x256xf32>
    %cst_24 = arith.constant 0.000000e+00 : f32
    %50 = vector.shape_cast %23 : vector<1x256xi1> to vector<1x256xi1>
    %51 = vector.broadcast %50 : vector<1x256xi1> to vector<4x256xi1>
    %52 = vector.broadcast %cst_24 : f32 to vector<4x256xf32>
    %53 = arith.select %51, %49, %52 : vector<4x256xi1>, vector<4x256xf32>
    %c20 = arith.constant 20 : index
    %c0_25 = arith.constant 0 : index
    %54 = vector.load %arg9[%c20, %c0_25] : memref<36x512xf32, #tpu.memory_space<vmem>>, vector<4x256xf32>
    tpu.vector_store %arg9[%c20, %c0_25], %53 {strides = array<i32>} : memref<36x512xf32, #tpu.memory_space<vmem>>, vector<4x256xf32>,
    %c0_26 = arith.constant 0 : index
    %c143 = arith.constant 143 : index
    %55 = vector.load %arg7[%c0_26, %c143] : memref<4x512xf32, #tpu.memory_space<vmem>>, vector<4x256xf32>
    %cst_27 = arith.constant 0.000000e+00 : f32
    %56 = vector.shape_cast %21 : vector<1x256xi1> to vector<1x256xi1>
    %57 = vector.broadcast %56 : vector<1x256xi1> to vector<4x256xi1>
    %58 = vector.broadcast %cst_27 : f32 to vector<4x256xf32>
    %59 = arith.select %57, %55, %58 : vector<4x256xi1>, vector<4x256xf32>
    %c24 = arith.constant 24 : index
    %c0_28 = arith.constant 0 : index
    %60 = vector.load %arg9[%c24, %c0_28] : memref<36x512xf32, #tpu.memory_space<vmem>>, vector<4x256xf32>
    tpu.vector_store %arg9[%c24, %c0_28], %59 {strides = array<i32>} : memref<36x512xf32, #tpu.memory_space<vmem>>, vector<4x256xf32>,
    %c0_29 = arith.constant 0 : index
    %c144 = arith.constant 144 : index
    %61 = vector.load %arg7[%c0_29, %c144] : memref<4x512xf32, #tpu.memory_space<vmem>>, vector<4x256xf32>
    %c28 = arith.constant 28 : index
    %c0_30 = arith.constant 0 : index
    %62 = vector.load %arg9[%c28, %c0_30] : memref<36x512xf32, #tpu.memory_space<vmem>>, vector<4x256xf32>
    tpu.vector_store %arg9[%c28, %c0_30], %61 {strides = array<i32>} : memref<36x512xf32, #tpu.memory_space<vmem>>, vector<4x256xf32>,
    %c0_31 = arith.constant 0 : index
    %c145 = arith.constant 145 : index
    %63 = vector.load %arg7[%c0_31, %c145] : memref<4x512xf32, #tpu.memory_space<vmem>>, vector<4x256xf32>
    %cst_32 = arith.constant 0.000000e+00 : f32
    %64 = vector.shape_cast %23 : vector<1x256xi1> to vector<1x256xi1>
    %65 = vector.broadcast %64 : vector<1x256xi1> to vector<4x256xi1>
    %66 = vector.broadcast %cst_32 : f32 to vector<4x256xf32>
    %67 = arith.select %65, %63, %66 : vector<4x256xi1>, vector<4x256xf32>
    %c32 = arith.constant 32 : index
    %c0_33 = arith.constant 0 : index
    %68 = vector.load %arg9[%c32, %c0_33] : memref<36x512xf32, #tpu.memory_space<vmem>>, vector<4x256xf32>
    tpu.vector_store %arg9[%c32, %c0_33], %67 {strides = array<i32>} : memref<36x512xf32, #tpu.memory_space<vmem>>, vector<4x256xf32>,
    %c1 = arith.constant 1 : index
    %c0_34 = arith.constant 0 : index
    %c0_35 = arith.constant 0 : index
    %69 = vector.load %arg1[%c1, %c0_34, %c0_35] : memref<2x4x256xf32, #tpu.memory_space<vmem>>, vector<1x4x256xf32>
    %70 = vector.shape_cast %69 : vector<1x4x256xf32> to vector<4x256xf32>
    %c0_36 = arith.constant 0 : index
    %c128_37 = arith.constant 128 : index
    %71 = vector.load %arg7[%c0_36, %c128_37] : memref<4x512xf32, #tpu.memory_space<vmem>>, vector<4x256xf32>
    tpu.vector_store %arg7[%c0_36, %c128_37], %70 {strides = array<i32>} : memref<4x512xf32, #tpu.memory_space<vmem>>, vector<4x256xf32>,
    %c0_38 = arith.constant 0 : index
    %c111_39 = arith.constant 111 : index
    %72 = vector.load %arg7[%c0_38, %c111_39] : memref<4x512xf32, #tpu.memory_space<vmem>>, vector<4x256xf32>
    %cst_40 = arith.constant 0.000000e+00 : f32
    %73 = vector.shape_cast %21 : vector<1x256xi1> to vector<1x256xi1>
    %74 = vector.broadcast %73 : vector<1x256xi1> to vector<4x256xi1>
    %75 = vector.broadcast %cst_40 : f32 to vector<4x256xf32>
    %76 = arith.select %74, %72, %75 : vector<4x256xi1>, vector<4x256xf32>
    %c0_41 = arith.constant 0 : index
    %c256 = arith.constant 256 : index
    %77 = vector.load %arg9[%c0_41, %c256] : memref<36x512xf32, #tpu.memory_space<vmem>>, vector<4x256xf32>
    tpu.vector_store %arg9[%c0_41, %c256], %76 {strides = array<i32>} : memref<36x512xf32, #tpu.memory_space<vmem>>, vector<4x256xf32>,
    %c0_42 = arith.constant 0 : index
    %c112_43 = arith.constant 112 : index
    %78 = vector.load %arg7[%c0_42, %c112_43] : memref<4x512xf32, #tpu.memory_space<vmem>>, vector<4x256xf32>
    %c4_44 = arith.constant 4 : index
    %c256_45 = arith.constant 256 : index
    %79 = vector.load %arg9[%c4_44, %c256_45] : memref<36x512xf32, #tpu.memory_space<vmem>>, vector<4x256xf32>
    tpu.vector_store %arg9[%c4_44, %c256_45], %78 {strides = array<i32>} : memref<36x512xf32, #tpu.memory_space<vmem>>, vector<4x256xf32>,
    %c0_46 = arith.constant 0 : index
    %c113_47 = arith.constant 113 : index
    %80 = vector.load %arg7[%c0_46, %c113_47] : memref<4x512xf32, #tpu.memory_space<vmem>>, vector<4x256xf32>
    %cst_48 = arith.constant 0.000000e+00 : f32
    %81 = vector.shape_cast %23 : vector<1x256xi1> to vector<1x256xi1>
    %82 = vector.broadcast %81 : vector<1x256xi1> to vector<4x256xi1>
    %83 = vector.broadcast %cst_48 : f32 to vector<4x256xf32>
    %84 = arith.select %82, %80, %83 : vector<4x256xi1>, vector<4x256xf32>
    %c8_49 = arith.constant 8 : index
    %c256_50 = arith.constant 256 : index
    %85 = vector.load %arg9[%c8_49, %c256_50] : memref<36x512xf32, #tpu.memory_space<vmem>>, vector<4x256xf32>
    tpu.vector_store %arg9[%c8_49, %c256_50], %84 {strides = array<i32>} : memref<36x512xf32, #tpu.memory_space<vmem>>, vector<4x256xf32>,
    %c0_51 = arith.constant 0 : index
    %c127_52 = arith.constant 127 : index
    %86 = vector.load %arg7[%c0_51, %c127_52] : memref<4x512xf32, #tpu.memory_space<vmem>>, vector<4x256xf32>
    %cst_53 = arith.constant 0.000000e+00 : f32
    %87 = vector.shape_cast %21 : vector<1x256xi1> to vector<1x256xi1>
    %88 = vector.broadcast %87 : vector<1x256xi1> to vector<4x256xi1>
    %89 = vector.broadcast %cst_53 : f32 to vector<4x256xf32>
    %90 = arith.select %88, %86, %89 : vector<4x256xi1>, vector<4x256xf32>
    %c12_54 = arith.constant 12 : index
    %c256_55 = arith.constant 256 : index
    %91 = vector.load %arg9[%c12_54, %c256_55] : memref<36x512xf32, #tpu.memory_space<vmem>>, vector<4x256xf32>
    tpu.vector_store %arg9[%c12_54, %c256_55], %90 {strides = array<i32>} : memref<36x512xf32, #tpu.memory_space<vmem>>, vector<4x256xf32>,
    %c0_56 = arith.constant 0 : index
    %c128_57 = arith.constant 128 : index
    %92 = vector.load %arg7[%c0_56, %c128_57] : memref<4x512xf32, #tpu.memory_space<vmem>>, vector<4x256xf32>
    %c16_58 = arith.constant 16 : index
    %c256_59 = arith.constant 256 : index
    %93 = vector.load %arg9[%c16_58, %c256_59] : memref<36x512xf32, #tpu.memory_space<vmem>>, vector<4x256xf32>
    tpu.vector_store %arg9[%c16_58, %c256_59], %92 {strides = array<i32>} : memref<36x512xf32, #tpu.memory_space<vmem>>, vector<4x256xf32>,
    %c0_60 = arith.constant 0 : index
    %c129_61 = arith.constant 129 : index
    %94 = vector.load %arg7[%c0_60, %c129_61] : memref<4x512xf32, #tpu.memory_space<vmem>>, vector<4x256xf32>
    %cst_62 = arith.constant 0.000000e+00 : f32
    %95 = vector.shape_cast %23 : vector<1x256xi1> to vector<1x256xi1>
    %96 = vector.broadcast %95 : vector<1x256xi1> to vector<4x256xi1>
    %97 = vector.broadcast %cst_62 : f32 to vector<4x256xf32>
    %98 = arith.select %96, %94, %97 : vector<4x256xi1>, vector<4x256xf32>
    %c20_63 = arith.constant 20 : index
    %c256_64 = arith.constant 256 : index
    %99 = vector.load %arg9[%c20_63, %c256_64] : memref<36x512xf32, #tpu.memory_space<vmem>>, vector<4x256xf32>
    tpu.vector_store %arg9[%c20_63, %c256_64], %98 {strides = array<i32>} : memref<36x512xf32, #tpu.memory_space<vmem>>, vector<4x256xf32>,
    %c0_65 = arith.constant 0 : index
    %c143_66 = arith.constant 143 : index
    %100 = vector.load %arg7[%c0_65, %c143_66] : memref<4x512xf32, #tpu.memory_space<vmem>>, vector<4x256xf32>
    %cst_67 = arith.constant 0.000000e+00 : f32
    %101 = vector.shape_cast %21 : vector<1x256xi1> to vector<1x256xi1>
    %102 = vector.broadcast %101 : vector<1x256xi1> to vector<4x256xi1>
    %103 = vector.broadcast %cst_67 : f32 to vector<4x256xf32>
    %104 = arith.select %102, %100, %103 : vector<4x256xi1>, vector<4x256xf32>
    %c24_68 = arith.constant 24 : index
    %c256_69 = arith.constant 256 : index
    %105 = vector.load %arg9[%c24_68, %c256_69] : memref<36x512xf32, #tpu.memory_space<vmem>>, vector<4x256xf32>
    tpu.vector_store %arg9[%c24_68, %c256_69], %104 {strides = array<i32>} : memref<36x512xf32, #tpu.memory_space<vmem>>, vector<4x256xf32>,
    %c0_70 = arith.constant 0 : index
    %c144_71 = arith.constant 144 : index
    %106 = vector.load %arg7[%c0_70, %c144_71] : memref<4x512xf32, #tpu.memory_space<vmem>>, vector<4x256xf32>
    %c28_72 = arith.constant 28 : index
    %c256_73 = arith.constant 256 : index
    %107 = vector.load %arg9[%c28_72, %c256_73] : memref<36x512xf32, #tpu.memory_space<vmem>>, vector<4x256xf32>
    tpu.vector_store %arg9[%c28_72, %c256_73], %106 {strides = array<i32>} : memref<36x512xf32, #tpu.memory_space<vmem>>, vector<4x256xf32>,
    %c0_74 = arith.constant 0 : index
    %c145_75 = arith.constant 145 : index
    %108 = vector.load %arg7[%c0_74, %c145_75] : memref<4x512xf32, #tpu.memory_space<vmem>>, vector<4x256xf32>
    %cst_76 = arith.constant 0.000000e+00 : f32
    %109 = vector.shape_cast %23 : vector<1x256xi1> to vector<1x256xi1>
    %110 = vector.broadcast %109 : vector<1x256xi1> to vector<4x256xi1>
    %111 = vector.broadcast %cst_76 : f32 to vector<4x256xf32>
    %112 = arith.select %110, %108, %111 : vector<4x256xi1>, vector<4x256xf32>
    %c32_77 = arith.constant 32 : index
    %c256_78 = arith.constant 256 : index
    %113 = vector.load %arg9[%c32_77, %c256_78] : memref<36x512xf32, #tpu.memory_space<vmem>>, vector<4x256xf32>
    tpu.vector_store %arg9[%c32_77, %c256_78], %112 {strides = array<i32>} : memref<36x512xf32, #tpu.memory_space<vmem>>, vector<4x256xf32>,
    %c0_79 = arith.constant 0 : index
    %c0_80 = arith.constant 0 : index
    %114 = vector.load %arg2[%c0_79, %c0_80] : memref<8x36xf32, #tpu.memory_space<vmem>>, vector<8x36xf32>
    %c0_81 = arith.constant 0 : index
    %c0_82 = arith.constant 0 : index
    %115 = vector.load %arg9[%c0_81, %c0_82] : memref<36x512xf32, #tpu.memory_space<vmem>>, vector<36x512xf32>
    %cst_83 = arith.constant dense<0.000000e+00> : vector<8x512xf32>
    %116 = tpu.matmul %114, %115, %cst_83 {dimension_numbers = #tpu.dot_dimension_numbers<[1], [0], [0], [1], [0, 0, 1, 1], [], []>} : vector<8x36xf32>, vector<36x512xf32>, vector<8x512xf32> -> vector<8x512xf32>
    %c0_84 = arith.constant 0 : index
    %c0_85 = arith.constant 0 : index
    %117 = vector.load %arg3[%c0_84, %c0_85] : memref<8x1xf32, #tpu.memory_space<vmem>>, vector<8x1xf32>
    %118 = vector.broadcast %117 : vector<8x1xf32> to vector<8x512xf32>
    %119 = arith.addf %116, %118 : vector<8x512xf32>
    %cst_86 = arith.constant 0.000000e+00 : f32
    %120 = vector.broadcast %cst_86 : f32 to vector<8x512xf32>
    %121 = arith.maximumf %119, %120 : vector<8x512xf32>
    %122 = vector.extract_strided_slice %121 {offsets = [0, 0], sizes = [8, 256], strides = [1, 1]} : vector<8x512xf32> to vector<8x256xf32>
    %c0_87 = arith.constant 0 : index
    %c128_88 = arith.constant 128 : index
    %123 = vector.load %arg8[%c0_87, %c128_88] : memref<8x512xf32, #tpu.memory_space<vmem>>, vector<8x256xf32>
    tpu.vector_store %arg8[%c0_87, %c128_88], %122 {strides = array<i32>} : memref<8x512xf32, #tpu.memory_space<vmem>>, vector<8x256xf32>,
    %c0_89 = arith.constant 0 : index
    %c111_90 = arith.constant 111 : index
    %124 = vector.load %arg8[%c0_89, %c111_90] : memref<8x512xf32, #tpu.memory_space<vmem>>, vector<8x256xf32>
    %cst_91 = arith.constant 0.000000e+00 : f32
    %125 = vector.shape_cast %21 : vector<1x256xi1> to vector<1x256xi1>
    %126 = vector.broadcast %125 : vector<1x256xi1> to vector<8x256xi1>
    %127 = vector.broadcast %cst_91 : f32 to vector<8x256xf32>
    %128 = arith.select %126, %124, %127 : vector<8x256xi1>, vector<8x256xf32>
    %c0_92 = arith.constant 0 : index
    %c0_93 = arith.constant 0 : index
    %129 = vector.load %arg10[%c0_92, %c0_93] : memref<72x512xf32, #tpu.memory_space<vmem>>, vector<8x256xf32>
    tpu.vector_store %arg10[%c0_92, %c0_93], %128 {strides = array<i32>} : memref<72x512xf32, #tpu.memory_space<vmem>>, vector<8x256xf32>,
    %c0_94 = arith.constant 0 : index
    %c112_95 = arith.constant 112 : index
    %130 = vector.load %arg8[%c0_94, %c112_95] : memref<8x512xf32, #tpu.memory_space<vmem>>, vector<8x256xf32>
    %c8_96 = arith.constant 8 : index
    %c0_97 = arith.constant 0 : index
    %131 = vector.load %arg10[%c8_96, %c0_97] : memref<72x512xf32, #tpu.memory_space<vmem>>, vector<8x256xf32>
    tpu.vector_store %arg10[%c8_96, %c0_97], %130 {strides = array<i32>} : memref<72x512xf32, #tpu.memory_space<vmem>>, vector<8x256xf32>,
    %c0_98 = arith.constant 0 : index
    %c113_99 = arith.constant 113 : index
    %132 = vector.load %arg8[%c0_98, %c113_99] : memref<8x512xf32, #tpu.memory_space<vmem>>, vector<8x256xf32>
    %cst_100 = arith.constant 0.000000e+00 : f32
    %133 = vector.shape_cast %23 : vector<1x256xi1> to vector<1x256xi1>
    %134 = vector.broadcast %133 : vector<1x256xi1> to vector<8x256xi1>
    %135 = vector.broadcast %cst_100 : f32 to vector<8x256xf32>
    %136 = arith.select %134, %132, %135 : vector<8x256xi1>, vector<8x256xf32>
    %c16_101 = arith.constant 16 : index
    %c0_102 = arith.constant 0 : index
    %137 = vector.load %arg10[%c16_101, %c0_102] : memref<72x512xf32, #tpu.memory_space<vmem>>, vector<8x256xf32>
    tpu.vector_store %arg10[%c16_101, %c0_102], %136 {strides = array<i32>} : memref<72x512xf32, #tpu.memory_space<vmem>>, vector<8x256xf32>,
    %c0_103 = arith.constant 0 : index
    %c127_104 = arith.constant 127 : index
    %138 = vector.load %arg8[%c0_103, %c127_104] : memref<8x512xf32, #tpu.memory_space<vmem>>, vector<8x256xf32>
    %cst_105 = arith.constant 0.000000e+00 : f32
    %139 = vector.shape_cast %21 : vector<1x256xi1> to vector<1x256xi1>
    %140 = vector.broadcast %139 : vector<1x256xi1> to vector<8x256xi1>
    %141 = vector.broadcast %cst_105 : f32 to vector<8x256xf32>
    %142 = arith.select %140, %138, %141 : vector<8x256xi1>, vector<8x256xf32>
    %c24_106 = arith.constant 24 : index
    %c0_107 = arith.constant 0 : index
    %143 = vector.load %arg10[%c24_106, %c0_107] : memref<72x512xf32, #tpu.memory_space<vmem>>, vector<8x256xf32>
    tpu.vector_store %arg10[%c24_106, %c0_107], %142 {strides = array<i32>} : memref<72x512xf32, #tpu.memory_space<vmem>>, vector<8x256xf32>,
    %c0_108 = arith.constant 0 : index
    %c128_109 = arith.constant 128 : index
    %144 = vector.load %arg8[%c0_108, %c128_109] : memref<8x512xf32, #tpu.memory_space<vmem>>, vector<8x256xf32>
    %c32_110 = arith.constant 32 : index
    %c0_111 = arith.constant 0 : index
    %145 = vector.load %arg10[%c32_110, %c0_111] : memref<72x512xf32, #tpu.memory_space<vmem>>, vector<8x256xf32>
    tpu.vector_store %arg10[%c32_110, %c0_111], %144 {strides = array<i32>} : memref<72x512xf32, #tpu.memory_space<vmem>>, vector<8x256xf32>,
    %c0_112 = arith.constant 0 : index
    %c129_113 = arith.constant 129 : index
    %146 = vector.load %arg8[%c0_112, %c129_113] : memref<8x512xf32, #tpu.memory_space<vmem>>, vector<8x256xf32>
    %cst_114 = arith.constant 0.000000e+00 : f32
    %147 = vector.shape_cast %23 : vector<1x256xi1> to vector<1x256xi1>
    %148 = vector.broadcast %147 : vector<1x256xi1> to vector<8x256xi1>
    %149 = vector.broadcast %cst_114 : f32 to vector<8x256xf32>
    %150 = arith.select %148, %146, %149 : vector<8x256xi1>, vector<8x256xf32>
    %c40 = arith.constant 40 : index
    %c0_115 = arith.constant 0 : index
    %151 = vector.load %arg10[%c40, %c0_115] : memref<72x512xf32, #tpu.memory_space<vmem>>, vector<8x256xf32>
    tpu.vector_store %arg10[%c40, %c0_115], %150 {strides = array<i32>} : memref<72x512xf32, #tpu.memory_space<vmem>>, vector<8x256xf32>,
    %c0_116 = arith.constant 0 : index
    %c143_117 = arith.constant 143 : index
    %152 = vector.load %arg8[%c0_116, %c143_117] : memref<8x512xf32, #tpu.memory_space<vmem>>, vector<8x256xf32>
    %cst_118 = arith.constant 0.000000e+00 : f32
    %153 = vector.shape_cast %21 : vector<1x256xi1> to vector<1x256xi1>
    %154 = vector.broadcast %153 : vector<1x256xi1> to vector<8x256xi1>
    %155 = vector.broadcast %cst_118 : f32 to vector<8x256xf32>
    %156 = arith.select %154, %152, %155 : vector<8x256xi1>, vector<8x256xf32>
    %c48 = arith.constant 48 : index
    %c0_119 = arith.constant 0 : index
    %157 = vector.load %arg10[%c48, %c0_119] : memref<72x512xf32, #tpu.memory_space<vmem>>, vector<8x256xf32>
    tpu.vector_store %arg10[%c48, %c0_119], %156 {strides = array<i32>} : memref<72x512xf32, #tpu.memory_space<vmem>>, vector<8x256xf32>,
    %c0_120 = arith.constant 0 : index
    %c144_121 = arith.constant 144 : index
    %158 = vector.load %arg8[%c0_120, %c144_121] : memref<8x512xf32, #tpu.memory_space<vmem>>, vector<8x256xf32>
    %c56 = arith.constant 56 : index
    %c0_122 = arith.constant 0 : index
    %159 = vector.load %arg10[%c56, %c0_122] : memref<72x512xf32, #tpu.memory_space<vmem>>, vector<8x256xf32>
    tpu.vector_store %arg10[%c56, %c0_122], %158 {strides = array<i32>} : memref<72x512xf32, #tpu.memory_space<vmem>>, vector<8x256xf32>,
    %c0_123 = arith.constant 0 : index
    %c145_124 = arith.constant 145 : index
    %160 = vector.load %arg8[%c0_123, %c145_124] : memref<8x512xf32, #tpu.memory_space<vmem>>, vector<8x256xf32>
    %cst_125 = arith.constant 0.000000e+00 : f32
    %161 = vector.shape_cast %23 : vector<1x256xi1> to vector<1x256xi1>
    %162 = vector.broadcast %161 : vector<1x256xi1> to vector<8x256xi1>
    %163 = vector.broadcast %cst_125 : f32 to vector<8x256xf32>
    %164 = arith.select %162, %160, %163 : vector<8x256xi1>, vector<8x256xf32>
    %c64 = arith.constant 64 : index
    %c0_126 = arith.constant 0 : index
    %165 = vector.load %arg10[%c64, %c0_126] : memref<72x512xf32, #tpu.memory_space<vmem>>, vector<8x256xf32>
    tpu.vector_store %arg10[%c64, %c0_126], %164 {strides = array<i32>} : memref<72x512xf32, #tpu.memory_space<vmem>>, vector<8x256xf32>,
    %166 = vector.extract_strided_slice %121 {offsets = [0, 256], sizes = [8, 256], strides = [1, 1]} : vector<8x512xf32> to vector<8x256xf32>
    %c0_127 = arith.constant 0 : index
    %c128_128 = arith.constant 128 : index
    %167 = vector.load %arg8[%c0_127, %c128_128] : memref<8x512xf32, #tpu.memory_space<vmem>>, vector<8x256xf32>
    tpu.vector_store %arg8[%c0_127, %c128_128], %166 {strides = array<i32>} : memref<8x512xf32, #tpu.memory_space<vmem>>, vector<8x256xf32>,
    %c0_129 = arith.constant 0 : index
    %c111_130 = arith.constant 111 : index
    %168 = vector.load %arg8[%c0_129, %c111_130] : memref<8x512xf32, #tpu.memory_space<vmem>>, vector<8x256xf32>
    %cst_131 = arith.constant 0.000000e+00 : f32
    %169 = vector.shape_cast %21 : vector<1x256xi1> to vector<1x256xi1>
    %170 = vector.broadcast %169 : vector<1x256xi1> to vector<8x256xi1>
    %171 = vector.broadcast %cst_131 : f32 to vector<8x256xf32>
    %172 = arith.select %170, %168, %171 : vector<8x256xi1>, vector<8x256xf32>
    %c0_132 = arith.constant 0 : index
    %c256_133 = arith.constant 256 : index
    %173 = vector.load %arg10[%c0_132, %c256_133] : memref<72x512xf32, #tpu.memory_space<vmem>>, vector<8x256xf32>
    tpu.vector_store %arg10[%c0_132, %c256_133], %172 {strides = array<i32>} : memref<72x512xf32, #tpu.memory_space<vmem>>, vector<8x256xf32>,
    %c0_134 = arith.constant 0 : index
    %c112_135 = arith.constant 112 : index
    %174 = vector.load %arg8[%c0_134, %c112_135] : memref<8x512xf32, #tpu.memory_space<vmem>>, vector<8x256xf32>
    %c8_136 = arith.constant 8 : index
    %c256_137 = arith.constant 256 : index
    %175 = vector.load %arg10[%c8_136, %c256_137] : memref<72x512xf32, #tpu.memory_space<vmem>>, vector<8x256xf32>
    tpu.vector_store %arg10[%c8_136, %c256_137], %174 {strides = array<i32>} : memref<72x512xf32, #tpu.memory_space<vmem>>, vector<8x256xf32>,
    %c0_138 = arith.constant 0 : index
    %c113_139 = arith.constant 113 : index
    %176 = vector.load %arg8[%c0_138, %c113_139] : memref<8x512xf32, #tpu.memory_space<vmem>>, vector<8x256xf32>
    %cst_140 = arith.constant 0.000000e+00 : f32
    %177 = vector.shape_cast %23 : vector<1x256xi1> to vector<1x256xi1>
    %178 = vector.broadcast %177 : vector<1x256xi1> to vector<8x256xi1>
    %179 = vector.broadcast %cst_140 : f32 to vector<8x256xf32>
    %180 = arith.select %178, %176, %179 : vector<8x256xi1>, vector<8x256xf32>
    %c16_141 = arith.constant 16 : index
    %c256_142 = arith.constant 256 : index
    %181 = vector.load %arg10[%c16_141, %c256_142] : memref<72x512xf32, #tpu.memory_space<vmem>>, vector<8x256xf32>
    tpu.vector_store %arg10[%c16_141, %c256_142], %180 {strides = array<i32>} : memref<72x512xf32, #tpu.memory_space<vmem>>, vector<8x256xf32>,
    %c0_143 = arith.constant 0 : index
    %c127_144 = arith.constant 127 : index
    %182 = vector.load %arg8[%c0_143, %c127_144] : memref<8x512xf32, #tpu.memory_space<vmem>>, vector<8x256xf32>
    %cst_145 = arith.constant 0.000000e+00 : f32
    %183 = vector.shape_cast %21 : vector<1x256xi1> to vector<1x256xi1>
    %184 = vector.broadcast %183 : vector<1x256xi1> to vector<8x256xi1>
    %185 = vector.broadcast %cst_145 : f32 to vector<8x256xf32>
    %186 = arith.select %184, %182, %185 : vector<8x256xi1>, vector<8x256xf32>
    %c24_146 = arith.constant 24 : index
    %c256_147 = arith.constant 256 : index
    %187 = vector.load %arg10[%c24_146, %c256_147] : memref<72x512xf32, #tpu.memory_space<vmem>>, vector<8x256xf32>
    tpu.vector_store %arg10[%c24_146, %c256_147], %186 {strides = array<i32>} : memref<72x512xf32, #tpu.memory_space<vmem>>, vector<8x256xf32>,
    %c0_148 = arith.constant 0 : index
    %c128_149 = arith.constant 128 : index
    %188 = vector.load %arg8[%c0_148, %c128_149] : memref<8x512xf32, #tpu.memory_space<vmem>>, vector<8x256xf32>
    %c32_150 = arith.constant 32 : index
    %c256_151 = arith.constant 256 : index
    %189 = vector.load %arg10[%c32_150, %c256_151] : memref<72x512xf32, #tpu.memory_space<vmem>>, vector<8x256xf32>
    tpu.vector_store %arg10[%c32_150, %c256_151], %188 {strides = array<i32>} : memref<72x512xf32, #tpu.memory_space<vmem>>, vector<8x256xf32>,
    %c0_152 = arith.constant 0 : index
    %c129_153 = arith.constant 129 : index
    %190 = vector.load %arg8[%c0_152, %c129_153] : memref<8x512xf32, #tpu.memory_space<vmem>>, vector<8x256xf32>
    %cst_154 = arith.constant 0.000000e+00 : f32
    %191 = vector.shape_cast %23 : vector<1x256xi1> to vector<1x256xi1>
    %192 = vector.broadcast %191 : vector<1x256xi1> to vector<8x256xi1>
    %193 = vector.broadcast %cst_154 : f32 to vector<8x256xf32>
    %194 = arith.select %192, %190, %193 : vector<8x256xi1>, vector<8x256xf32>
    %c40_155 = arith.constant 40 : index
    %c256_156 = arith.constant 256 : index
    %195 = vector.load %arg10[%c40_155, %c256_156] : memref<72x512xf32, #tpu.memory_space<vmem>>, vector<8x256xf32>
    tpu.vector_store %arg10[%c40_155, %c256_156], %194 {strides = array<i32>} : memref<72x512xf32, #tpu.memory_space<vmem>>, vector<8x256xf32>,
    %c0_157 = arith.constant 0 : index
    %c143_158 = arith.constant 143 : index
    %196 = vector.load %arg8[%c0_157, %c143_158] : memref<8x512xf32, #tpu.memory_space<vmem>>, vector<8x256xf32>
    %cst_159 = arith.constant 0.000000e+00 : f32
    %197 = vector.shape_cast %21 : vector<1x256xi1> to vector<1x256xi1>
    %198 = vector.broadcast %197 : vector<1x256xi1> to vector<8x256xi1>
    %199 = vector.broadcast %cst_159 : f32 to vector<8x256xf32>
    %200 = arith.select %198, %196, %199 : vector<8x256xi1>, vector<8x256xf32>
    %c48_160 = arith.constant 48 : index
    %c256_161 = arith.constant 256 : index
    %201 = vector.load %arg10[%c48_160, %c256_161] : memref<72x512xf32, #tpu.memory_space<vmem>>, vector<8x256xf32>
    tpu.vector_store %arg10[%c48_160, %c256_161], %200 {strides = array<i32>} : memref<72x512xf32, #tpu.memory_space<vmem>>, vector<8x256xf32>,
    %c0_162 = arith.constant 0 : index
    %c144_163 = arith.constant 144 : index
    %202 = vector.load %arg8[%c0_162, %c144_163] : memref<8x512xf32, #tpu.memory_space<vmem>>, vector<8x256xf32>
    %c56_164 = arith.constant 56 : index
    %c256_165 = arith.constant 256 : index
    %203 = vector.load %arg10[%c56_164, %c256_165] : memref<72x512xf32, #tpu.memory_space<vmem>>, vector<8x256xf32>
    tpu.vector_store %arg10[%c56_164, %c256_165], %202 {strides = array<i32>} : memref<72x512xf32, #tpu.memory_space<vmem>>, vector<8x256xf32>,
    %c0_166 = arith.constant 0 : index
    %c145_167 = arith.constant 145 : index
    %204 = vector.load %arg8[%c0_166, %c145_167] : memref<8x512xf32, #tpu.memory_space<vmem>>, vector<8x256xf32>
    %cst_168 = arith.constant 0.000000e+00 : f32
    %205 = vector.shape_cast %23 : vector<1x256xi1> to vector<1x256xi1>
    %206 = vector.broadcast %205 : vector<1x256xi1> to vector<8x256xi1>
    %207 = vector.broadcast %cst_168 : f32 to vector<8x256xf32>
    %208 = arith.select %206, %204, %207 : vector<8x256xi1>, vector<8x256xf32>
    %c64_169 = arith.constant 64 : index
    %c256_170 = arith.constant 256 : index
    %209 = vector.load %arg10[%c64_169, %c256_170] : memref<72x512xf32, #tpu.memory_space<vmem>>, vector<8x256xf32>
    tpu.vector_store %arg10[%c64_169, %c256_170], %208 {strides = array<i32>} : memref<72x512xf32, #tpu.memory_space<vmem>>, vector<8x256xf32>,
    %c0_171 = arith.constant 0 : index
    %c0_172 = arith.constant 0 : index
    %210 = vector.load %arg4[%c0_171, %c0_172] : memref<8x72xf32, #tpu.memory_space<vmem>>, vector<8x72xf32>
    %c0_173 = arith.constant 0 : index
    %c0_174 = arith.constant 0 : index
    %211 = vector.load %arg10[%c0_173, %c0_174] : memref<72x512xf32, #tpu.memory_space<vmem>>, vector<72x512xf32>
    %cst_175 = arith.constant dense<0.000000e+00> : vector<8x512xf32>
    %212 = tpu.matmul %210, %211, %cst_175 {dimension_numbers = #tpu.dot_dimension_numbers<[1], [0], [0], [1], [0, 0, 1, 1], [], []>} : vector<8x72xf32>, vector<72x512xf32>, vector<8x512xf32> -> vector<8x512xf32>
    %c0_176 = arith.constant 0 : index
    %c0_177 = arith.constant 0 : index
    %213 = vector.load %arg5[%c0_176, %c0_177] : memref<8x1xf32, #tpu.memory_space<vmem>>, vector<8x1xf32>
    %214 = vector.broadcast %213 : vector<8x1xf32> to vector<8x512xf32>
    %215 = arith.addf %212, %214 : vector<8x512xf32>
    %cst_178 = arith.constant 0.000000e+00 : f32
    %216 = vector.broadcast %cst_178 : f32 to vector<8x512xf32>
    %217 = arith.maximumf %215, %216 : vector<8x512xf32>
    %218 = vector.extract_strided_slice %217 {offsets = [0, 0], sizes = [8, 256], strides = [1, 1]} : vector<8x512xf32> to vector<8x256xf32>
    %c0_179 = arith.constant 0 : index
    %c0_180 = arith.constant 0 : index
    %c0_181 = arith.constant 0 : index
    %219 = vector.load %arg6[%c0_179, %c0_180, %c0_181] : memref<2x8x256xf32, #tpu.memory_space<vmem>>, vector<1x8x256xf32>
    %220 = vector.shape_cast %219 : vector<1x8x256xf32> to vector<8x256xf32>
    %221 = vector.shape_cast %218 : vector<8x256xf32> to vector<1x8x256xf32>
    tpu.vector_store %arg6[%c0_179, %c0_180, %c0_181], %221 {strides = array<i32>} : memref<2x8x256xf32, #tpu.memory_space<vmem>>, vector<1x8x256xf32>,
    %222 = vector.extract_strided_slice %217 {offsets = [0, 256], sizes = [8, 256], strides = [1, 1]} : vector<8x512xf32> to vector<8x256xf32>
    %c1_182 = arith.constant 1 : index
    %c0_183 = arith.constant 0 : index
    %c0_184 = arith.constant 0 : index
    %223 = vector.load %arg6[%c1_182, %c0_183, %c0_184] : memref<2x8x256xf32, #tpu.memory_space<vmem>>, vector<1x8x256xf32>
    %224 = vector.shape_cast %223 : vector<1x8x256xf32> to vector<8x256xf32>
    %225 = vector.shape_cast %222 : vector<8x256xf32> to vector<1x8x256xf32>
    tpu.vector_store %arg6[%c1_182, %c0_183, %c0_184], %225 {strides = array<i32>} : memref<2x8x256xf32, #tpu.memory_space<vmem>>, vector<1x8x256xf32>,
    return
  }
  func.func @transform_0(%arg0: i32) -> (i32, i32, i32) {
    %c0_i32 = arith.constant 0 : i32
    %c0_i32_0 = arith.constant 0 : i32
    %c0_i32_1 = arith.constant 0 : i32
    return %arg0, %c0_i32, %c0_i32_0 : i32, i32, i32
  }
  func.func @transform_1(%arg0: i32) -> (i32, i32) {
    %c0_i32 = arith.constant 0 : i32
    %c0_i32_0 = arith.constant 0 : i32
    %c0_i32_1 = arith.constant 0 : i32
    return %c0_i32, %c0_i32_0 : i32, i32
  }
  func.func @transform_2(%arg0: i32) -> (i32, i32) {
    %c0_i32 = arith.constant 0 : i32
    %c0_i32_0 = arith.constant 0 : i32
    %c0_i32_1 = arith.constant 0 : i32
    return %c0_i32, %c0_i32_0 : i32, i32
  }
  func.func @transform_3(%arg0: i32) -> (i32, i32) {
    %c0_i32 = arith.constant 0 : i32
    %c0_i32_0 = arith.constant 0 : i32
    %c0_i32_1 = arith.constant 0 : i32
    return %c0_i32, %c0_i32_0 : i32, i32
  }
  func.func @transform_4(%arg0: i32) -> (i32, i32) {
    %c0_i32 = arith.constant 0 : i32
    %c0_i32_0 = arith.constant 0 : i32
    %c0_i32_1 = arith.constant 0 : i32
    return %c0_i32, %c0_i32_0 : i32, i32
  }
  func.func @transform_5(%arg0: i32) -> (i32, i32, i32) {
    %c0_i32 = arith.constant 0 : i32
    %c0_i32_0 = arith.constant 0 : i32
    %c0_i32_1 = arith.constant 0 : i32
    return %arg0, %c0_i32, %c0_i32_0 : i32, i32, i32
  }
}

</mosaic_0001>

<llo_original>
// kernel: conv_block.1
$region0: #{conv_block.1}
  #allocation0 [shape = 'u32[]', space=smem, size = 0x4, offset = 0x4, fixed_abs, tag = 'smem constant byte address 0x4 - core index']
  #allocation1 [shape = 'u32[72,128]{1,0:T(1,128)}', space=vmem, size = 0x9000, scoped, tag = 'internal scratch']
  #allocation2 [shape = 'f32[4,512]{1,0:T(4,128)}', space=vmem, size = 0x2000, scoped, tag = 'scratch operand']
  #allocation3 [shape = 'f32[8,512]{1,0:T(8,128)}', space=vmem, size = 0x4000, scoped, tag = 'scratch operand']
  #allocation4 [shape = 'f32[36,512]{1,0:T(8,128)}', space=vmem, size = 0x14000, scoped, tag = 'scratch operand']
  #allocation5 [shape = 'f32[72,512]{1,0:T(8,128)}', space=vmem, size = 0x24000, scoped, tag = 'scratch operand']
  %s0 = inlined_call_operand.vmem [shape: f32[2,4,256], index: 0, kind: input, shape index: {}]
  %s1 = inlined_call_operand.vmem [shape: f32[8,36], index: 1, kind: input, shape index: {}]
  %s2 = inlined_call_operand.vmem [shape: f32[8,1], index: 2, kind: input, shape index: {}]
  %s3 = inlined_call_operand.vmem [shape: f32[8,72], index: 3, kind: input, shape index: {}]
  %s4 = inlined_call_operand.vmem [shape: f32[8,1], index: 4, kind: input, shape index: {}]
  %s5 = inlined_call_operand.vmem [shape: f32[2,8,256], index: 5, kind: output, shape index: {}]
  %s6 = sld [smem:[#allocation0]]
  $region34: #{conv_block.1} parent=0
    _
  %s8 = ssub.s32 1, %s6
  %s9 = scalar_select 0, %s8, %s6
  // Predicated region
  $region2: #{conv_block.1} parent=0 // pred_check
    _
  $region3: #{conv_block.1} parent=0 // pred_check_branch
    %11 = sbr.rel (0) target = $region5
  $region4: #{conv_block.1} parent=0 // pred_region
    _
  $region5: #{conv_block.1} parent=0 // pred_fallthru
    _
  // Predicated region
  $region6: #{conv_block.1} parent=0 // pred_check
    _
  $region7: #{conv_block.1} parent=0 // pred_check_branch
    %13 = sbr.rel (0) target = $region9
  $region8: #{conv_block.1} parent=0 // pred_region
    _
  $region9: #{conv_block.1} parent=0 // pred_fallthru
    _
  // Predicated region
  $region10: #{conv_block.1} parent=0 // pred_check
    _
  $region11: #{conv_block.1} parent=0 // pred_check_branch
    %15 = sbr.rel (0) target = $region13
  $region12: #{conv_block.1} parent=0 // pred_region
    _
  $region13: #{conv_block.1} parent=0 // pred_fallthru
    _
  // Predicated region
  $region14: #{conv_block.1} parent=0 // pred_check
    _
  $region15: #{conv_block.1} parent=0 // pred_check_branch
    %17 = sbr.rel (0) target = $region17
  $region16: #{conv_block.1} parent=0 // pred_region
    _
  $region17: #{conv_block.1} parent=0 // pred_fallthru
    _
  // Predicated region
  $region18: #{conv_block.1} parent=0 // pred_check
    _
  $region19: #{conv_block.1} parent=0 // pred_check_branch
    %19 = sbr.rel (0) target = $region21
  $region20: #{conv_block.1} parent=0 // pred_region
    _
  $region21: #{conv_block.1} parent=0 // pred_fallthru
    _
  %p20 = scmp.eq.s32.totalorder 0, 0
  // Predicated region
  $region22: #{conv_block.1} parent=0 // pred_check
    %p21 = pneg %p20
  $region23: #{conv_block.1} parent=0 // pred_check_branch
    %23 = sbr.rel (%p21) target = $region25
  $region24: #{conv_block.1} parent=0 // pred_region
    %24 = vst [vmem:[#allocation2] sm:$0xf] 0.0
    %25 = vst [vmem:[#allocation2 + $0xc] sm:$0xf] 0.0
    %26 = vst [vmem:[#allocation3] sm:$0xff] 0.0
    %27 = vst [vmem:[#allocation3 + $0x18] sm:$0xff] 0.0
  $region25: #{conv_block.1} parent=0 // pred_fallthru
    _
  %v28 = vlaneseq
  %v29 = vand.u32 %v28, 127
  %v30 = vadd.s32 %v29, 128
  %vm31 = vcmp.lt.s32.totalorder %v29, 0
  %v32 = vsub.s32 0, %v29
  %v33 = vsel %vm31, %v32, %v29
  %v34 = vshrl.u32 %v33, 4
  %v35 = vand.u32 %v33, 15
  %v36 = vsub.s32 0, %v35
  %v37 = vsel %vm31, %v36, %v35
  %vm38 = vcmp.lt.s32.totalorder %v30, 0
  %v39 = vsub.s32 0, %v30
  %v40 = vsel %vm38, %v39, %v30
  %v41 = vshrl.u32 %v40, 4
  %v42 = vand.u32 %v40, 15
  %v43 = vsub.s32 0, %v42
  %v44 = vsel %vm38, %v43, %v42
  %vm45 = vcmp.ne.s32.totalorder %v37, 0
  %vm46 = vcmp.ne.s32.totalorder %v44, 0
  %vm47 = vcmp.lt.s32.totalorder %v37, 0
  %vm48 = vcmp.lt.s32.totalorder %v44, 0
  %vm49 = vmand %vm47, %vm45
  %vm50 = vmand %vm48, %vm46
  %v51 = vadd.s32 %v37, 16
  %v52 = vadd.s32 %v44, 16
  %v53 = vsel %vm49, %v51, %v37
  %v54 = vsel %vm50, %v52, %v44
  %vm55 = vcmp.ne.s32.totalorder %v53, 0
  %vm56 = vcmp.ne.s32.totalorder %v54, 0
  %vm57 = vcmp.ne.s32.totalorder %v53, 15
  %vm58 = vcmp.ne.s32.totalorder %v54, 15
  %v59 = vld [vmem:[%s0] sm:$0xff]
  %60 = vst [vmem:[#allocation2 + $0x4] sm:$0xff] %v59
  %v61 = vld [vmem:[#allocation2] sm:$0xff]
  %v62 = vld [vmem:[#allocation2 + $0x8] sm:$0xf]
  %v63 = vsel %vm55, 1, 0
  %v64 = vsel %vm56, 1, 0
  %vm65 = vcmp.eq.s32.totalorder %v63, 1
  %vm66 = vcmp.eq.s32.totalorder %v64, 1
  %69 = vst [vmem:[#allocation1] ss:$2 sm:$0xff] %v61
  %s70 = scalar_lea.vmem [#allocation1], 16
  %71 = vst [vmem:[%s70] ss:$2 sm:$0xff] %v62
  %v72 = vld.sshfl [vmem:[#allocation1] sm:$0xff pattern:$0x75316420]
  %v73 = vld.sshfl [vmem:[#allocation1 + $0x8] sm:$0xff pattern:$0x75316420]
  %v74 = vld.sshfl [vmem:[#allocation1 + $0x10] sm:$0xff pattern:$0x75316420]
  %75 = vrot.lane.b32.xlu0 %v72, 17
  %v76 = vpop.permute.xlu0 %75
  %77 = vrot.lane.b32.xlu0 %v73, 17
  %v78 = vpop.permute.xlu0 %77
  %79 = vrot.lane.b32.xlu0 %v74, 17
  %v80 = vpop.permute.xlu0 %79
  %vm81 = vcmask 138240
  %v82 = vsel %vm81, %v76, %v78
  %v83 = vsel %vm81, %v78, %v80
  %v86 = vsel %vm65, %v82, 0.0
  %v87 = vsel %vm66, %v83, 0.0
  %88 = vst [vmem:[#allocation4] sm:$0xf] %v86
  %89 = vst [vmem:[#allocation4 + $0x8] sm:$0xf] %v87
  %v90 = vld [vmem:[#allocation2] sm:$0xff]
  %v91 = vld [vmem:[#allocation2 + $0x8] sm:$0xf]
  %s94 = scalar_lea.vmem [#allocation1], 1
  %95 = vst [vmem:[%s94] ss:$2 sm:$0xff] %v90
  %s96 = scalar_lea.vmem [#allocation1], 17
  %97 = vst [vmem:[%s96] ss:$2 sm:$0xff] %v91
  %v98 = vld.sshfl [vmem:[#allocation1] sm:$0xff pattern:$0x75316420]
  %v99 = vld.sshfl [vmem:[#allocation1 + $0x8] sm:$0xff pattern:$0x75316420]
  %v100 = vld.sshfl [vmem:[#allocation1 + $0x10] sm:$0xff pattern:$0x75316420]
  %101 = vrot.lane.b32.xlu0 %v98, 16
  %v102 = vpop.permute.xlu0 %101
  %103 = vrot.lane.b32.xlu0 %v99, 16
  %v104 = vpop.permute.xlu0 %103
  %105 = vrot.lane.b32.xlu0 %v100, 16
  %v106 = vpop.permute.xlu0 %105
  %vm107 = vcmask 130048
  %v108 = vsel %vm107, %v102, %v104
  %v109 = vsel %vm107, %v104, %v106
  %112 = vst [vmem:[#allocation4] sm:$0xf0] %v108
  %113 = vst [vmem:[#allocation4 + $0x8] sm:$0xf0] %v109
  %v114 = vld [vmem:[#allocation2] sm:$0xff]
  %v115 = vld [vmem:[#allocation2 + $0x8] sm:$0xf]
  %v116 = vsel %vm57, 1, 0
  %v117 = vsel %vm58, 1, 0
  %vm118 = vcmp.eq.s32.totalorder %v116, 1
  %vm119 = vcmp.eq.s32.totalorder %v117, 1
  %122 = vst [vmem:[#allocation1] ss:$2 sm:$0xff] %v114
  %s123 = scalar_lea.vmem [#allocation1], 16
  %124 = vst [vmem:[%s123] ss:$2 sm:$0xff] %v115
  %v125 = vld.sshfl [vmem:[#allocation1] sm:$0xff pattern:$0x75316420]
  %v126 = vld.sshfl [vmem:[#allocation1 + $0x8] sm:$0xff pattern:$0x75316420]
  %v127 = vld.sshfl [vmem:[#allocation1 + $0x10] sm:$0xff pattern:$0x75316420]
  %128 = vrot.lane.b32.xlu0 %v125, 15
  %v129 = vpop.permute.xlu0 %128
  %130 = vrot.lane.b32.xlu0 %v126, 15
  %v131 = vpop.permute.xlu0 %130
  %132 = vrot.lane.b32.xlu0 %v127, 15
  %v133 = vpop.permute.xlu0 %132
  %vm134 = vcmask 121856
  %v135 = vsel %vm134, %v129, %v131
  %v136 = vsel %vm134, %v131, %v133
  %v139 = vsel %vm118, %v135, 0.0
  %v140 = vsel %vm119, %v136, 0.0
  %141 = vst [vmem:[#allocation4 + $0x20] sm:$0xf] %v139
  %142 = vst [vmem:[#allocation4 + $0x28] sm:$0xf] %v140
  %v143 = vld [vmem:[#allocation2] sm:$0xff]
  %v144 = vld [vmem:[#allocation2 + $0x8] sm:$0xf]
  %147 = vst [vmem:[#allocation1] ss:$2 sm:$0xff] %v143
  %s148 = scalar_lea.vmem [#allocation1], 16
  %149 = vst [vmem:[%s148] ss:$2 sm:$0xff] %v144
  %v150 = vld.sshfl [vmem:[#allocation1] sm:$0xff pattern:$0x75316420]
  %v151 = vld.sshfl [vmem:[#allocation1 + $0x8] sm:$0xff pattern:$0x75316420]
  %v152 = vld.sshfl [vmem:[#allocation1 + $0x10] sm:$0xff pattern:$0x75316420]
  %153 = vrot.lane.b32.xlu0 %v150, 1
  %v154 = vpop.permute.xlu0 %153
  %155 = vrot.lane.b32.xlu0 %v151, 1
  %v156 = vpop.permute.xlu0 %155
  %157 = vrot.lane.b32.xlu0 %v152, 1
  %v158 = vpop.permute.xlu0 %157
  %vm159 = vcmask 7168
  %v160 = vsel %vm159, %v154, %v156
  %v161 = vsel %vm159, %v156, %v158
  %v164 = vsel %vm65, %v160, 0.0
  %v165 = vsel %vm66, %v161, 0.0
  %v168 = vrot.slane %v164, 4
  %v169 = vrot.slane %v165, 4
  %172 = vst [vmem:[#allocation4 + $0x20] sm:$0xf0] %v168
  %173 = vst [vmem:[#allocation4 + $0x28] sm:$0xf0] %v169
  %v174 = vld [vmem:[#allocation2 + $0x4] sm:$0xff]
  %176 = vst [vmem:[#allocation1] ss:$2 sm:$0xff] %v174
  %v177 = vld.sshfl [vmem:[#allocation1] sm:$0xff pattern:$0x75316420]
  %v178 = vld.sshfl [vmem:[#allocation1 + $0x8] sm:$0xff pattern:$0x75316420]
  %181 = vst [vmem:[#allocation4 + $0x40] sm:$0xf] %v177
  %182 = vst [vmem:[#allocation4 + $0x48] sm:$0xf] %v178
  %v183 = vld [vmem:[#allocation2 + $0x4] sm:$0xff]
  %v184 = vld [vmem:[#allocation2 + $0xc] sm:$0xf]
  %187 = vst [vmem:[#allocation1] ss:$2 sm:$0xff] %v183
  %s188 = scalar_lea.vmem [#allocation1], 16
  %189 = vst [vmem:[%s188] ss:$2 sm:$0xff] %v184
  %v190 = vld.sshfl [vmem:[#allocation1] sm:$0xff pattern:$0x75316420]
  %v191 = vld.sshfl [vmem:[#allocation1 + $0x8] sm:$0xff pattern:$0x75316420]
  %v192 = vld.sshfl [vmem:[#allocation1 + $0x10] sm:$0xff pattern:$0x75316420]
  %193 = vrot.lane.b32.xlu0 %v190, 127
  %v194 = vpop.permute.xlu0 %193
  %195 = vrot.lane.b32.xlu0 %v191, 127
  %v196 = vpop.permute.xlu0 %195
  %197 = vrot.lane.b32.xlu0 %v192, 127
  %v198 = vpop.permute.xlu0 %197
  %vm199 = vcmask 1039360
  %v200 = vsel %vm199, %v194, %v196
  %v201 = vsel %vm199, %v196, %v198
  %v204 = vsel %vm118, %v200, 0.0
  %v205 = vsel %vm119, %v201, 0.0
  %v208 = vrot.slane %v204, 4
  %v209 = vrot.slane %v205, 4
  %212 = vst [vmem:[#allocation4 + $0x40] sm:$0xf0] %v208
  %213 = vst [vmem:[#allocation4 + $0x48] sm:$0xf0] %v209
  %v214 = vld [vmem:[#allocation2 + $0x4] sm:$0xff]
  %v215 = vld [vmem:[#allocation2 + $0xc] sm:$0xf]
  %218 = vst [vmem:[#allocation1] ss:$2 sm:$0xff] %v214
  %s219 = scalar_lea.vmem [#allocation1], 16
  %220 = vst [vmem:[%s219] ss:$2 sm:$0xff] %v215
  %v221 = vld.sshfl [vmem:[#allocation1] sm:$0xff pattern:$0x75316420]
  %v222 = vld.sshfl [vmem:[#allocation1 + $0x8] sm:$0xff pattern:$0x75316420]
  %v223 = vld.sshfl [vmem:[#allocation1 + $0x10] sm:$0xff pattern:$0x75316420]
  %224 = vrot.lane.b32.xlu0 %v221, 113
  %v225 = vpop.permute.xlu0 %224
  %226 = vrot.lane.b32.xlu0 %v222, 113
  %v227 = vpop.permute.xlu0 %226
  %228 = vrot.lane.b32.xlu0 %v223, 113
  %v229 = vpop.permute.xlu0 %228
  %vm230 = vcmask 924672
  %v231 = vsel %vm230, %v225, %v227
  %v232 = vsel %vm230, %v227, %v229
  %v235 = vsel %vm65, %v231, 0.0
  %v236 = vsel %vm66, %v232, 0.0
  %237 = vst [vmem:[#allocation4 + $0x60] sm:$0xf] %v235
  %238 = vst [vmem:[#allocation4 + $0x68] sm:$0xf] %v236
  %v239 = vld [vmem:[#allocation2 + $0x4] sm:$0xff]
  %v240 = vld [vmem:[#allocation2 + $0xc] sm:$0xf]
  %s243 = scalar_lea.vmem [#allocation1], 1
  %244 = vst [vmem:[%s243] ss:$2 sm:$0xff] %v239
  %s245 = scalar_lea.vmem [#allocation1], 17
  %246 = vst [vmem:[%s245] ss:$2 sm:$0xff] %v240
  %v247 = vld.sshfl [vmem:[#allocation1] sm:$0xff pattern:$0x75316420]
  %v248 = vld.sshfl [vmem:[#allocation1 + $0x8] sm:$0xff pattern:$0x75316420]
  %v249 = vld.sshfl [vmem:[#allocation1 + $0x10] sm:$0xff pattern:$0x75316420]
  %250 = vrot.lane.b32.xlu0 %v247, 112
  %v251 = vpop.permute.xlu0 %250
  %252 = vrot.lane.b32.xlu0 %v248, 112
  %v253 = vpop.permute.xlu0 %252
  %254 = vrot.lane.b32.xlu0 %v249, 112
  %v255 = vpop.permute.xlu0 %254
  %vm256 = vcmask 916480
  %v257 = vsel %vm256, %v251, %v253
  %v258 = vsel %vm256, %v253, %v255
  %261 = vst [vmem:[#allocation4 + $0x60] sm:$0xf0] %v257
  %262 = vst [vmem:[#allocation4 + $0x68] sm:$0xf0] %v258
  %v263 = vld [vmem:[#allocation2 + $0x4] sm:$0xff]
  %v264 = vld [vmem:[#allocation2 + $0xc] sm:$0xf]
  %267 = vst [vmem:[#allocation1] ss:$2 sm:$0xff] %v263
  %s268 = scalar_lea.vmem [#allocation1], 16
  %269 = vst [vmem:[%s268] ss:$2 sm:$0xff] %v264
  %v270 = vld.sshfl [vmem:[#allocation1] sm:$0xff pattern:$0x75316420]
  %v271 = vld.sshfl [vmem:[#allocation1 + $0x8] sm:$0xff pattern:$0x75316420]
  %v272 = vld.sshfl [vmem:[#allocation1 + $0x10] sm:$0xff pattern:$0x75316420]
  %273 = vrot.lane.b32.xlu0 %v270, 111
  %v274 = vpop.permute.xlu0 %273
  %275 = vrot.lane.b32.xlu0 %v271, 111
  %v276 = vpop.permute.xlu0 %275
  %277 = vrot.lane.b32.xlu0 %v272, 111
  %v278 = vpop.permute.xlu0 %277
  %vm279 = vcmask 908288
  %v280 = vsel %vm279, %v274, %v276
  %v281 = vsel %vm279, %v276, %v278
  %v284 = vsel %vm118, %v280, 0.0
  %v285 = vsel %vm119, %v281, 0.0
  %286 = vst [vmem:[#allocation4 + $0x80] sm:$0xf] %v284
  %287 = vst [vmem:[#allocation4 + $0x88] sm:$0xf] %v285
  %s288 = scalar_lea.vmem %s0, 8
  %v289 = vld [vmem:[%s288] sm:$0xff]
  %290 = vst [vmem:[#allocation2 + $0x4] sm:$0xff] %v289
  %v291 = vld [vmem:[#allocation2] sm:$0xff]
  %v292 = vld [vmem:[#allocation2 + $0x8] sm:$0xf]
  %295 = vst [vmem:[#allocation1] ss:$2 sm:$0xff] %v291
  %s296 = scalar_lea.vmem [#allocation1], 16
  %297 = vst [vmem:[%s296] ss:$2 sm:$0xff] %v292
  %v298 = vld.sshfl [vmem:[#allocation1] sm:$0xff pattern:$0x75316420]
  %v299 = vld.sshfl [vmem:[#allocation1 + $0x8] sm:$0xff pattern:$0x75316420]
  %v300 = vld.sshfl [vmem:[#allocation1 + $0x10] sm:$0xff pattern:$0x75316420]
  %301 = vrot.lane.b32.xlu0 %v298, 17
  %v302 = vpop.permute.xlu0 %301
  %303 = vrot.lane.b32.xlu0 %v299, 17
  %v304 = vpop.permute.xlu0 %303
  %305 = vrot.lane.b32.xlu0 %v300, 17
  %v306 = vpop.permute.xlu0 %305
  %v307 = vsel %vm81, %v302, %v304
  %v308 = vsel %vm81, %v304, %v306
  %v311 = vsel %vm65, %v307, 0.0
  %v312 = vsel %vm66, %v308, 0.0
  %313 = vst [vmem:[#allocation4 + $0x10] sm:$0xf] %v311
  %314 = vst [vmem:[#allocation4 + $0x18] sm:$0xf] %v312
  %v315 = vld [vmem:[#allocation2] sm:$0xff]
  %v316 = vld [vmem:[#allocation2 + $0x8] sm:$0xf]
  %s319 = scalar_lea.vmem [#allocation1], 1
  %320 = vst [vmem:[%s319] ss:$2 sm:$0xff] %v315
  %s321 = scalar_lea.vmem [#allocation1], 17
  %322 = vst [vmem:[%s321] ss:$2 sm:$0xff] %v316
  %v323 = vld.sshfl [vmem:[#allocation1] sm:$0xff pattern:$0x75316420]
  %v324 = vld.sshfl [vmem:[#allocation1 + $0x8] sm:$0xff pattern:$0x75316420]
  %v325 = vld.sshfl [vmem:[#allocation1 + $0x10] sm:$0xff pattern:$0x75316420]
  %326 = vrot.lane.b32.xlu0 %v323, 16
  %v327 = vpop.permute.xlu0 %326
  %328 = vrot.lane.b32.xlu0 %v324, 16
  %v329 = vpop.permute.xlu0 %328
  %330 = vrot.lane.b32.xlu0 %v325, 16
  %v331 = vpop.permute.xlu0 %330
  %v332 = vsel %vm107, %v327, %v329
  %v333 = vsel %vm107, %v329, %v331
  %336 = vst [vmem:[#allocation4 + $0x10] sm:$0xf0] %v332
  %337 = vst [vmem:[#allocation4 + $0x18] sm:$0xf0] %v333
  %v338 = vld [vmem:[#allocation2] sm:$0xff]
  %v339 = vld [vmem:[#allocation2 + $0x8] sm:$0xf]
  %342 = vst [vmem:[#allocation1] ss:$2 sm:$0xff] %v338
  %s343 = scalar_lea.vmem [#allocation1], 16
  %344 = vst [vmem:[%s343] ss:$2 sm:$0xff] %v339
  %v345 = vld.sshfl [vmem:[#allocation1] sm:$0xff pattern:$0x75316420]
  %v346 = vld.sshfl [vmem:[#allocation1 + $0x8] sm:$0xff pattern:$0x75316420]
  %v347 = vld.sshfl [vmem:[#allocation1 + $0x10] sm:$0xff pattern:$0x75316420]
  %348 = vrot.lane.b32.xlu0 %v345, 15
  %v349 = vpop.permute.xlu0 %348
  %350 = vrot.lane.b32.xlu0 %v346, 15
  %v351 = vpop.permute.xlu0 %350
  %352 = vrot.lane.b32.xlu0 %v347, 15
  %v353 = vpop.permute.xlu0 %352
  %v354 = vsel %vm134, %v349, %v351
  %v355 = vsel %vm134, %v351, %v353
  %v358 = vsel %vm118, %v354, 0.0
  %v359 = vsel %vm119, %v355, 0.0
  %360 = vst [vmem:[#allocation4 + $0x30] sm:$0xf] %v358
  %361 = vst [vmem:[#allocation4 + $0x38] sm:$0xf] %v359
  %v362 = vld [vmem:[#allocation2] sm:$0xff]
  %v363 = vld [vmem:[#allocation2 + $0x8] sm:$0xf]
  %366 = vst [vmem:[#allocation1] ss:$2 sm:$0xff] %v362
  %s367 = scalar_lea.vmem [#allocation1], 16
  %368 = vst [vmem:[%s367] ss:$2 sm:$0xff] %v363
  %v369 = vld.sshfl [vmem:[#allocation1] sm:$0xff pattern:$0x75316420]
  %v370 = vld.sshfl [vmem:[#allocation1 + $0x8] sm:$0xff pattern:$0x75316420]
  %v371 = vld.sshfl [vmem:[#allocation1 + $0x10] sm:$0xff pattern:$0x75316420]
  %372 = vrot.lane.b32.xlu0 %v369, 1
  %v373 = vpop.permute.xlu0 %372
  %374 = vrot.lane.b32.xlu0 %v370, 1
  %v375 = vpop.permute.xlu0 %374
  %376 = vrot.lane.b32.xlu0 %v371, 1
  %v377 = vpop.permute.xlu0 %376
  %v378 = vsel %vm159, %v373, %v375
  %v379 = vsel %vm159, %v375, %v377
  %v382 = vsel %vm65, %v378, 0.0
  %v383 = vsel %vm66, %v379, 0.0
  %v386 = vrot.slane %v382, 4
  %v387 = vrot.slane %v383, 4
  %390 = vst [vmem:[#allocation4 + $0x30] sm:$0xf0] %v386
  %391 = vst [vmem:[#allocation4 + $0x38] sm:$0xf0] %v387
  %v392 = vld [vmem:[#allocation2 + $0x4] sm:$0xff]
  %394 = vst [vmem:[#allocation1] ss:$2 sm:$0xff] %v392
  %v395 = vld.sshfl [vmem:[#allocation1] sm:$0xff pattern:$0x75316420]
  %v396 = vld.sshfl [vmem:[#allocation1 + $0x8] sm:$0xff pattern:$0x75316420]
  %399 = vst [vmem:[#allocation4 + $0x50] sm:$0xf] %v395
  %400 = vst [vmem:[#allocation4 + $0x58] sm:$0xf] %v396
  %v401 = vld [vmem:[#allocation2 + $0x4] sm:$0xff]
  %v402 = vld [vmem:[#allocation2 + $0xc] sm:$0xf]
  %405 = vst [vmem:[#allocation1] ss:$2 sm:$0xff] %v401
  %s406 = scalar_lea.vmem [#allocation1], 16
  %407 = vst [vmem:[%s406] ss:$2 sm:$0xff] %v402
  %v408 = vld.sshfl [vmem:[#allocation1] sm:$0xff pattern:$0x75316420]
  %v409 = vld.sshfl [vmem:[#allocation1 + $0x8] sm:$0xff pattern:$0x75316420]
  %v410 = vld.sshfl [vmem:[#allocation1 + $0x10] sm:$0xff pattern:$0x75316420]
  %411 = vrot.lane.b32.xlu0 %v408, 127
  %v412 = vpop.permute.xlu0 %411
  %413 = vrot.lane.b32.xlu0 %v409, 127
  %v414 = vpop.permute.xlu0 %413
  %415 = vrot.lane.b32.xlu0 %v410, 127
  %v416 = vpop.permute.xlu0 %415
  %v417 = vsel %vm199, %v412, %v414
  %v418 = vsel %vm199, %v414, %v416
  %v421 = vsel %vm118, %v417, 0.0
  %v422 = vsel %vm119, %v418, 0.0
  %v425 = vrot.slane %v421, 4
  %v426 = vrot.slane %v422, 4
  %429 = vst [vmem:[#allocation4 + $0x50] sm:$0xf0] %v425
  %430 = vst [vmem:[#allocation4 + $0x58] sm:$0xf0] %v426
  %v431 = vld [vmem:[#allocation2 + $0x4] sm:$0xff]
  %v432 = vld [vmem:[#allocation2 + $0xc] sm:$0xf]
  %435 = vst [vmem:[#allocation1] ss:$2 sm:$0xff] %v431
  %s436 = scalar_lea.vmem [#allocation1], 16
  %437 = vst [vmem:[%s436] ss:$2 sm:$0xff] %v432
  %v438 = vld.sshfl [vmem:[#allocation1] sm:$0xff pattern:$0x75316420]
  %v439 = vld.sshfl [vmem:[#allocation1 + $0x8] sm:$0xff pattern:$0x75316420]
  %v440 = vld.sshfl [vmem:[#allocation1 + $0x10] sm:$0xff pattern:$0x75316420]
  %441 = vrot.lane.b32.xlu0 %v438, 113
  %v442 = vpop.permute.xlu0 %441
  %443 = vrot.lane.b32.xlu0 %v439, 113
  %v444 = vpop.permute.xlu0 %443
  %445 = vrot.lane.b32.xlu0 %v440, 113
  %v446 = vpop.permute.xlu0 %445
  %v447 = vsel %vm230, %v442, %v444
  %v448 = vsel %vm230, %v444, %v446
  %v451 = vsel %vm65, %v447, 0.0
  %v452 = vsel %vm66, %v448, 0.0
  %453 = vst [vmem:[#allocation4 + $0x70] sm:$0xf] %v451
  %454 = vst [vmem:[#allocation4 + $0x78] sm:$0xf] %v452
  %v455 = vld [vmem:[#allocation2 + $0x4] sm:$0xff]
  %v456 = vld [vmem:[#allocation2 + $0xc] sm:$0xf]
  %s459 = scalar_lea.vmem [#allocation1], 1
  %460 = vst [vmem:[%s459] ss:$2 sm:$0xff] %v455
  %s461 = scalar_lea.vmem [#allocation1], 17
  %462 = vst [vmem:[%s461] ss:$2 sm:$0xff] %v456
  %v463 = vld.sshfl [vmem:[#allocation1] sm:$0xff pattern:$0x75316420]
  %v464 = vld.sshfl [vmem:[#allocation1 + $0x8] sm:$0xff pattern:$0x75316420]
  %v465 = vld.sshfl [vmem:[#allocation1 + $0x10] sm:$0xff pattern:$0x75316420]
  %466 = vrot.lane.b32.xlu0 %v463, 112
  %v467 = vpop.permute.xlu0 %466
  %468 = vrot.lane.b32.xlu0 %v464, 112
  %v469 = vpop.permute.xlu0 %468
  %470 = vrot.lane.b32.xlu0 %v465, 112
  %v471 = vpop.permute.xlu0 %470
  %v472 = vsel %vm256, %v467, %v469
  %v473 = vsel %vm256, %v469, %v471
  %476 = vst [vmem:[#allocation4 + $0x70] sm:$0xf0] %v472
  %477 = vst [vmem:[#allocation4 + $0x78] sm:$0xf0] %v473
  %v478 = vld [vmem:[#allocation2 + $0x4] sm:$0xff]
  %v479 = vld [vmem:[#allocation2 + $0xc] sm:$0xf]
  %482 = vst [vmem:[#allocation1] ss:$2 sm:$0xff] %v478
  %s483 = scalar_lea.vmem [#allocation1], 16
  %484 = vst [vmem:[%s483] ss:$2 sm:$0xff] %v479
  %v485 = vld.sshfl [vmem:[#allocation1] sm:$0xff pattern:$0x75316420]
  %v486 = vld.sshfl [vmem:[#allocation1 + $0x8] sm:$0xff pattern:$0x75316420]
  %v487 = vld.sshfl [vmem:[#allocation1 + $0x10] sm:$0xff pattern:$0x75316420]
  %488 = vrot.lane.b32.xlu0 %v485, 111
  %v489 = vpop.permute.xlu0 %488
  %490 = vrot.lane.b32.xlu0 %v486, 111
  %v491 = vpop.permute.xlu0 %490
  %492 = vrot.lane.b32.xlu0 %v487, 111
  %v493 = vpop.permute.xlu0 %492
  %v494 = vsel %vm279, %v489, %v491
  %v495 = vsel %vm279, %v491, %v493
  %v498 = vsel %vm118, %v494, 0.0
  %v499 = vsel %vm119, %v495, 0.0
  %500 = vst [vmem:[#allocation4 + $0x90] sm:$0xf] %v498
  %501 = vst [vmem:[#allocation4 + $0x98] sm:$0xf] %v499
  %v502 = vld [vmem:[%s1] sm:$0xff]
  %v503 = vld [vmem:[#allocation4] sm:$0xff]
  %v504 = vld [vmem:[#allocation4 + $0x8] sm:$0xff]
  %v505 = vld [vmem:[#allocation4 + $0x10] sm:$0xff]
  %v506 = vld [vmem:[#allocation4 + $0x18] sm:$0xff]
  %v507 = vld [vmem:[#allocation4 + $0x20] sm:$0xff]
  %v508 = vld [vmem:[#allocation4 + $0x28] sm:$0xff]
  %v509 = vld [vmem:[#allocation4 + $0x30] sm:$0xff]
  %v510 = vld [vmem:[#allocation4 + $0x38] sm:$0xff]
  %v511 = vld [vmem:[#allocation4 + $0x40] sm:$0xff]
  %v512 = vld [vmem:[#allocation4 + $0x48] sm:$0xff]
  %v513 = vld [vmem:[#allocation4 + $0x50] sm:$0xff]
  %v514 = vld [vmem:[#allocation4 + $0x58] sm:$0xff]
  %v515 = vld [vmem:[#allocation4 + $0x60] sm:$0xff]
  %v516 = vld [vmem:[#allocation4 + $0x68] sm:$0xff]
  %v517 = vld [vmem:[#allocation4 + $0x70] sm:$0xff]
  %v518 = vld [vmem:[#allocation4 + $0x78] sm:$0xff]
  %v519 = vld [vmem:[#allocation4 + $0x80] sm:$0xf]
  %v520 = vld [vmem:[#allocation4 + $0x88] sm:$0xf]
  %v521 = vld [vmem:[#allocation4 + $0x90] sm:$0xf]
  %v522 = vld [vmem:[#allocation4 + $0x98] sm:$0xf]
  %v523 = vld [vmem:[%s2] sm:$0xff]
  %525 = vset.pattern.permute.xlu0 0
  %526 = vperm.xlu0 %525, %v523
  %v527 = vpop.permute.xlu0 %526
  %vm529 = vcmask 293888
  %v531 = vsel %vm529, %v502, 0
  %vm533 = vcmask 1043456
  %v535 = vsel %vm533, %v519, 0
  %v538 = vsel %vm533, %v520, 0
  %v541 = vsel %vm533, %v521, 0
  %v544 = vsel %vm533, %v522, 0
  %546 = vmatpush.msra.mxu0 0.0
  %547 = vmatpush.msra.mxu0 0.0
  %548 = vmatpush.msra.mxu0 0.0
  %549 = vmatpush.msra.mxu0 0.0
  %550 = vmatpush.msra.mxu0 0.0
  %551 = vmatpush.msra.mxu0 0.0
  %552 = vmatpush.msra.mxu0 0.0
  %553 = vmatpush.msra.mxu0 0.0
  %554 = vmatpush.msra.mxu0 0.0
  %555 = vmatpush.msra.mxu0 0.0
  %556 = vmatpush.msra.mxu0 0.0
  %557 = vmatpush.msra.mxu0 %v535
  %558 = vmatpush.msra.mxu0 %v515
  %559 = vmatpush.msra.mxu0 %v511
  %560 = vmatpush.msra.mxu0 %v507
  %561 = vmatpush.msra.mxu0 %v503
  %562 = vmatmul.f32.gmra.mxu0 %v531
  %v563 = vpop.f32.mrf.mxu0
  %v564 = vadd.f32 %v527, %v563
  %565 = vdwg.mxu0
  %566 = vmatpush.msra.mxu0 0.0
  %567 = vmatpush.msra.mxu0 0.0
  %568 = vmatpush.msra.mxu0 0.0
  %569 = vmatpush.msra.mxu0 0.0
  %570 = vmatpush.msra.mxu0 0.0
  %571 = vmatpush.msra.mxu0 0.0
  %572 = vmatpush.msra.mxu0 0.0
  %573 = vmatpush.msra.mxu0 0.0
  %574 = vmatpush.msra.mxu0 0.0
  %575 = vmatpush.msra.mxu0 0.0
  %576 = vmatpush.msra.mxu0 0.0
  %577 = vmatpush.msra.mxu0 %v538
  %578 = vmatpush.msra.mxu0 %v516
  %579 = vmatpush.msra.mxu0 %v512
  %580 = vmatpush.msra.mxu0 %v508
  %581 = vmatpush.msra.mxu0 %v504
  %582 = vmatmul.f32.gmra.mxu0 %v531
  %v583 = vpop.f32.mrf.mxu0
  %v584 = vadd.f32 %v527, %v583
  %585 = vdwg.mxu0
  %586 = vmatpush.msra.mxu0 0.0
  %587 = vmatpush.msra.mxu0 0.0
  %588 = vmatpush.msra.mxu0 0.0
  %589 = vmatpush.msra.mxu0 0.0
  %590 = vmatpush.msra.mxu0 0.0
  %591 = vmatpush.msra.mxu0 0.0
  %592 = vmatpush.msra.mxu0 0.0
  %593 = vmatpush.msra.mxu0 0.0
  %594 = vmatpush.msra.mxu0 0.0
  %595 = vmatpush.msra.mxu0 0.0
  %596 = vmatpush.msra.mxu0 0.0
  %597 = vmatpush.msra.mxu0 %v541
  %598 = vmatpush.msra.mxu0 %v517
  %599 = vmatpush.msra.mxu0 %v513
  %600 = vmatpush.msra.mxu0 %v509
  %601 = vmatpush.msra.mxu0 %v505
  %602 = vmatmul.f32.gmra.mxu0 %v531
  %v603 = vpop.f32.mrf.mxu0
  %v604 = vadd.f32 %v527, %v603
  %605 = vdwg.mxu0
  %606 = vmatpush.msra.mxu0 0.0
  %607 = vmatpush.msra.mxu0 0.0
  %608 = vmatpush.msra.mxu0 0.0
  %609 = vmatpush.msra.mxu0 0.0
  %610 = vmatpush.msra.mxu0 0.0
  %611 = vmatpush.msra.mxu0 0.0
  %612 = vmatpush.msra.mxu0 0.0
  %613 = vmatpush.msra.mxu0 0.0
  %614 = vmatpush.msra.mxu0 0.0
  %615 = vmatpush.msra.mxu0 0.0
  %616 = vmatpush.msra.mxu0 0.0
  %617 = vmatpush.msra.mxu0 %v544
  %618 = vmatpush.msra.mxu0 %v518
  %619 = vmatpush.msra.mxu0 %v514
  %620 = vmatpush.msra.mxu0 %v510
  %621 = vmatpush.msra.mxu0 %v506
  %622 = vmatmul.f32.gmra.mxu0 %v531
  %v623 = vpop.f32.mrf.mxu0
  %v624 = vadd.f32 %v527, %v623
  %625 = vdwg.mxu0
  %v626 = vmax.f32 %v564, 0.0
  %v627 = vmax.f32 %v584, 0.0
  %v628 = vmax.f32 %v604, 0.0
  %v629 = vmax.f32 %v624, 0.0
  %630 = vst [vmem:[#allocation3 + $0x8] sm:$0xff] %v626
  %631 = vst [vmem:[#allocation3 + $0x10] sm:$0xff] %v627
  %v632 = vld [vmem:[#allocation3] sm:$0xff]
  %v633 = vld [vmem:[#allocation3 + $0x8] sm:$0xff]
  %v634 = vld [vmem:[#allocation3 + $0x10] sm:$0xff]
  %638 = vrot.lane.b32.xlu0 %v632, 17
  %v639 = vpop.permute.xlu0 %638
  %640 = vrot.lane.b32.xlu0 %v633, 17
  %v641 = vpop.permute.xlu0 %640
  %642 = vrot.lane.b32.xlu0 %v634, 17
  %v643 = vpop.permute.xlu0 %642
  %v644 = vsel %vm81, %v639, %v641
  %v645 = vsel %vm81, %v641, %v643
  %v648 = vsel %vm65, %v644, 0.0
  %v649 = vsel %vm66, %v645, 0.0
  %650 = vst [vmem:[#allocation5] sm:$0xff] %v648
  %651 = vst [vmem:[#allocation5 + $0x8] sm:$0xff] %v649
  %v652 = vld [vmem:[#allocation3] sm:$0xff]
  %v653 = vld [vmem:[#allocation3 + $0x8] sm:$0xff]
  %v654 = vld [vmem:[#allocation3 + $0x10] sm:$0xff]
  %658 = vrot.lane.b32.xlu0 %v652, 16
  %v659 = vpop.permute.xlu0 %658
  %660 = vrot.lane.b32.xlu0 %v653, 16
  %v661 = vpop.permute.xlu0 %660
  %662 = vrot.lane.b32.xlu0 %v654, 16
  %v663 = vpop.permute.xlu0 %662
  %v664 = vsel %vm107, %v659, %v661
  %v665 = vsel %vm107, %v661, %v663
  %668 = vst [vmem:[#allocation5 + $0x20] sm:$0xff] %v664
  %669 = vst [vmem:[#allocation5 + $0x28] sm:$0xff] %v665
  %v670 = vld [vmem:[#allocation3] sm:$0xff]
  %v671 = vld [vmem:[#allocation3 + $0x8] sm:$0xff]
  %v672 = vld [vmem:[#allocation3 + $0x10] sm:$0xff]
  %676 = vrot.lane.b32.xlu0 %v670, 15
  %v677 = vpop.permute.xlu0 %676
  %678 = vrot.lane.b32.xlu0 %v671, 15
  %v679 = vpop.permute.xlu0 %678
  %680 = vrot.lane.b32.xlu0 %v672, 15
  %v681 = vpop.permute.xlu0 %680
  %v682 = vsel %vm134, %v677, %v679
  %v683 = vsel %vm134, %v679, %v681
  %v686 = vsel %vm118, %v682, 0.0
  %v687 = vsel %vm119, %v683, 0.0
  %688 = vst [vmem:[#allocation5 + $0x40] sm:$0xff] %v686
  %689 = vst [vmem:[#allocation5 + $0x48] sm:$0xff] %v687
  %v690 = vld [vmem:[#allocation3] sm:$0xff]
  %v691 = vld [vmem:[#allocation3 + $0x8] sm:$0xff]
  %v692 = vld [vmem:[#allocation3 + $0x10] sm:$0xff]
  %696 = vrot.lane.b32.xlu0 %v690, 1
  %v697 = vpop.permute.xlu0 %696
  %698 = vrot.lane.b32.xlu0 %v691, 1
  %v699 = vpop.permute.xlu0 %698
  %700 = vrot.lane.b32.xlu0 %v692, 1
  %v701 = vpop.permute.xlu0 %700
  %v702 = vsel %vm159, %v697, %v699
  %v703 = vsel %vm159, %v699, %v701
  %v706 = vsel %vm65, %v702, 0.0
  %v707 = vsel %vm66, %v703, 0.0
  %708 = vst [vmem:[#allocation5 + $0x60] sm:$0xff] %v706
  %709 = vst [vmem:[#allocation5 + $0x68] sm:$0xff] %v707
  %v710 = vld [vmem:[#allocation3 + $0x8] sm:$0xff]
  %v711 = vld [vmem:[#allocation3 + $0x10] sm:$0xff]
  %712 = vst [vmem:[#allocation5 + $0x80] sm:$0xff] %v710
  %713 = vst [vmem:[#allocation5 + $0x88] sm:$0xff] %v711
  %v714 = vld [vmem:[#allocation3 + $0x8] sm:$0xff]
  %v715 = vld [vmem:[#allocation3 + $0x10] sm:$0xff]
  %v716 = vld [vmem:[#allocation3 + $0x18] sm:$0xff]
  %720 = vrot.lane.b32.xlu0 %v714, 127
  %v721 = vpop.permute.xlu0 %720
  %722 = vrot.lane.b32.xlu0 %v715, 127
  %v723 = vpop.permute.xlu0 %722
  %724 = vrot.lane.b32.xlu0 %v716, 127
  %v725 = vpop.permute.xlu0 %724
  %v726 = vsel %vm199, %v721, %v723
  %v727 = vsel %vm199, %v723, %v725
  %v730 = vsel %vm118, %v726, 0.0
  %v731 = vsel %vm119, %v727, 0.0
  %732 = vst [vmem:[#allocation5 + $0xa0] sm:$0xff] %v730
  %733 = vst [vmem:[#allocation5 + $0xa8] sm:$0xff] %v731
  %v734 = vld [vmem:[#allocation3 + $0x8] sm:$0xff]
  %v735 = vld [vmem:[#allocation3 + $0x10] sm:$0xff]
  %v736 = vld [vmem:[#allocation3 + $0x18] sm:$0xff]
  %740 = vrot.lane.b32.xlu0 %v734, 113
  %v741 = vpop.permute.xlu0 %740
  %742 = vrot.lane.b32.xlu0 %v735, 113
  %v743 = vpop.permute.xlu0 %742
  %744 = vrot.lane.b32.xlu0 %v736, 113
  %v745 = vpop.permute.xlu0 %744
  %v746 = vsel %vm230, %v741, %v743
  %v747 = vsel %vm230, %v743, %v745
  %v750 = vsel %vm65, %v746, 0.0
  %v751 = vsel %vm66, %v747, 0.0
  %752 = vst [vmem:[#allocation5 + $0xc0] sm:$0xff] %v750
  %753 = vst [vmem:[#allocation5 + $0xc8] sm:$0xff] %v751
  %v754 = vld [vmem:[#allocation3 + $0x8] sm:$0xff]
  %v755 = vld [vmem:[#allocation3 + $0x10] sm:$0xff]
  %v756 = vld [vmem:[#allocation3 + $0x18] sm:$0xff]
  %760 = vrot.lane.b32.xlu0 %v754, 112
  %v761 = vpop.permute.xlu0 %760
  %762 = vrot.lane.b32.xlu0 %v755, 112
  %v763 = vpop.permute.xlu0 %762
  %764 = vrot.lane.b32.xlu0 %v756, 112
  %v765 = vpop.permute.xlu0 %764
  %v766 = vsel %vm256, %v761, %v763
  %v767 = vsel %vm256, %v763, %v765
  %770 = vst [vmem:[#allocation5 + $0xe0] sm:$0xff] %v766
  %771 = vst [vmem:[#allocation5 + $0xe8] sm:$0xff] %v767
  %v772 = vld [vmem:[#allocation3 + $0x8] sm:$0xff]
  %v773 = vld [vmem:[#allocation3 + $0x10] sm:$0xff]
  %v774 = vld [vmem:[#allocation3 + $0x18] sm:$0xff]
  %778 = vrot.lane.b32.xlu0 %v772, 111
  %v779 = vpop.permute.xlu0 %778
  %780 = vrot.lane.b32.xlu0 %v773, 111
  %v781 = vpop.permute.xlu0 %780
  %782 = vrot.lane.b32.xlu0 %v774, 111
  %v783 = vpop.permute.xlu0 %782
  %v784 = vsel %vm279, %v779, %v781
  %v785 = vsel %vm279, %v781, %v783
  %v788 = vsel %vm118, %v784, 0.0
  %v789 = vsel %vm119, %v785, 0.0
  %790 = vst [vmem:[#allocation5 + $0x100] sm:$0xff] %v788
  %791 = vst [vmem:[#allocation5 + $0x108] sm:$0xff] %v789
  %792 = vst [vmem:[#allocation3 + $0x8] sm:$0xff] %v628
  %793 = vst [vmem:[#allocation3 + $0x10] sm:$0xff] %v629
  %v794 = vld [vmem:[#allocation3] sm:$0xff]
  %v795 = vld [vmem:[#allocation3 + $0x8] sm:$0xff]
  %v796 = vld [vmem:[#allocation3 + $0x10] sm:$0xff]
  %800 = vrot.lane.b32.xlu0 %v794, 17
  %v801 = vpop.permute.xlu0 %800
  %802 = vrot.lane.b32.xlu0 %v795, 17
  %v803 = vpop.permute.xlu0 %802
  %804 = vrot.lane.b32.xlu0 %v796, 17
  %v805 = vpop.permute.xlu0 %804
  %v806 = vsel %vm81, %v801, %v803
  %v807 = vsel %vm81, %v803, %v805
  %v810 = vsel %vm65, %v806, 0.0
  %v811 = vsel %vm66, %v807, 0.0
  %812 = vst [vmem:[#allocation5 + $0x10] sm:$0xff] %v810
  %813 = vst [vmem:[#allocation5 + $0x18] sm:$0xff] %v811
  %v814 = vld [vmem:[#allocation3] sm:$0xff]
  %v815 = vld [vmem:[#allocation3 + $0x8] sm:$0xff]
  %v816 = vld [vmem:[#allocation3 + $0x10] sm:$0xff]
  %820 = vrot.lane.b32.xlu0 %v814, 16
  %v821 = vpop.permute.xlu0 %820
  %822 = vrot.lane.b32.xlu0 %v815, 16
  %v823 = vpop.permute.xlu0 %822
  %824 = vrot.lane.b32.xlu0 %v816, 16
  %v825 = vpop.permute.xlu0 %824
  %v826 = vsel %vm107, %v821, %v823
  %v827 = vsel %vm107, %v823, %v825
  %830 = vst [vmem:[#allocation5 + $0x30] sm:$0xff] %v826
  %831 = vst [vmem:[#allocation5 + $0x38] sm:$0xff] %v827
  %v832 = vld [vmem:[#allocation3] sm:$0xff]
  %v833 = vld [vmem:[#allocation3 + $0x8] sm:$0xff]
  %v834 = vld [vmem:[#allocation3 + $0x10] sm:$0xff]
  %838 = vrot.lane.b32.xlu0 %v832, 15
  %v839 = vpop.permute.xlu0 %838
  %840 = vrot.lane.b32.xlu0 %v833, 15
  %v841 = vpop.permute.xlu0 %840
  %842 = vrot.lane.b32.xlu0 %v834, 15
  %v843 = vpop.permute.xlu0 %842
  %v844 = vsel %vm134, %v839, %v841
  %v845 = vsel %vm134, %v841, %v843
  %v848 = vsel %vm118, %v844, 0.0
  %v849 = vsel %vm119, %v845, 0.0
  %850 = vst [vmem:[#allocation5 + $0x50] sm:$0xff] %v848
  %851 = vst [vmem:[#allocation5 + $0x58] sm:$0xff] %v849
  %v852 = vld [vmem:[#allocation3] sm:$0xff]
  %v853 = vld [vmem:[#allocation3 + $0x8] sm:$0xff]
  %v854 = vld [vmem:[#allocation3 + $0x10] sm:$0xff]
  %858 = vrot.lane.b32.xlu0 %v852, 1
  %v859 = vpop.permute.xlu0 %858
  %860 = vrot.lane.b32.xlu0 %v853, 1
  %v861 = vpop.permute.xlu0 %860
  %862 = vrot.lane.b32.xlu0 %v854, 1
  %v863 = vpop.permute.xlu0 %862
  %v864 = vsel %vm159, %v859, %v861
  %v865 = vsel %vm159, %v861, %v863
  %v868 = vsel %vm65, %v864, 0.0
  %v869 = vsel %vm66, %v865, 0.0
  %870 = vst [vmem:[#allocation5 + $0x70] sm:$0xff] %v868
  %871 = vst [vmem:[#allocation5 + $0x78] sm:$0xff] %v869
  %v872 = vld [vmem:[#allocation3 + $0x8] sm:$0xff]
  %v873 = vld [vmem:[#allocation3 + $0x10] sm:$0xff]
  %874 = vst [vmem:[#allocation5 + $0x90] sm:$0xff] %v872
  %875 = vst [vmem:[#allocation5 + $0x98] sm:$0xff] %v873
  %v876 = vld [vmem:[#allocation3 + $0x8] sm:$0xff]
  %v877 = vld [vmem:[#allocation3 + $0x10] sm:$0xff]
  %v878 = vld [vmem:[#allocation3 + $0x18] sm:$0xff]
  %882 = vrot.lane.b32.xlu0 %v876, 127
  %v883 = vpop.permute.xlu0 %882
  %884 = vrot.lane.b32.xlu0 %v877, 127
  %v885 = vpop.permute.xlu0 %884
  %886 = vrot.lane.b32.xlu0 %v878, 127
  %v887 = vpop.permute.xlu0 %886
  %v888 = vsel %vm199, %v883, %v885
  %v889 = vsel %vm199, %v885, %v887
  %v892 = vsel %vm118, %v888, 0.0
  %v893 = vsel %vm119, %v889, 0.0
  %894 = vst [vmem:[#allocation5 + $0xb0] sm:$0xff] %v892
  %895 = vst [vmem:[#allocation5 + $0xb8] sm:$0xff] %v893
  %v896 = vld [vmem:[#allocation3 + $0x8] sm:$0xff]
  %v897 = vld [vmem:[#allocation3 + $0x10] sm:$0xff]
  %v898 = vld [vmem:[#allocation3 + $0x18] sm:$0xff]
  %902 = vrot.lane.b32.xlu0 %v896, 113
  %v903 = vpop.permute.xlu0 %902
  %904 = vrot.lane.b32.xlu0 %v897, 113
  %v905 = vpop.permute.xlu0 %904
  %906 = vrot.lane.b32.xlu0 %v898, 113
  %v907 = vpop.permute.xlu0 %906
  %v908 = vsel %vm230, %v903, %v905
  %v909 = vsel %vm230, %v905, %v907
  %v912 = vsel %vm65, %v908, 0.0
  %v913 = vsel %vm66, %v909, 0.0
  %914 = vst [vmem:[#allocation5 + $0xd0] sm:$0xff] %v912
  %915 = vst [vmem:[#allocation5 + $0xd8] sm:$0xff] %v913
  %v916 = vld [vmem:[#allocation3 + $0x8] sm:$0xff]
  %v917 = vld [vmem:[#allocation3 + $0x10] sm:$0xff]
  %v918 = vld [vmem:[#allocation3 + $0x18] sm:$0xff]
  %922 = vrot.lane.b32.xlu0 %v916, 112
  %v923 = vpop.permute.xlu0 %922
  %924 = vrot.lane.b32.xlu0 %v917, 112
  %v925 = vpop.permute.xlu0 %924
  %926 = vrot.lane.b32.xlu0 %v918, 112
  %v927 = vpop.permute.xlu0 %926
  %v928 = vsel %vm256, %v923, %v925
  %v929 = vsel %vm256, %v925, %v927
  %932 = vst [vmem:[#allocation5 + $0xf0] sm:$0xff] %v928
  %933 = vst [vmem:[#allocation5 + $0xf8] sm:$0xff] %v929
  %v934 = vld [vmem:[#allocation3 + $0x8] sm:$0xff]
  %v935 = vld [vmem:[#allocation3 + $0x10] sm:$0xff]
  %v936 = vld [vmem:[#allocation3 + $0x18] sm:$0xff]
  %940 = vrot.lane.b32.xlu0 %v934, 111
  %v941 = vpop.permute.xlu0 %940
  %942 = vrot.lane.b32.xlu0 %v935, 111
  %v943 = vpop.permute.xlu0 %942
  %944 = vrot.lane.b32.xlu0 %v936, 111
  %v945 = vpop.permute.xlu0 %944
  %v946 = vsel %vm279, %v941, %v943
  %v947 = vsel %vm279, %v943, %v945
  %v950 = vsel %vm118, %v946, 0.0
  %v951 = vsel %vm119, %v947, 0.0
  %952 = vst [vmem:[#allocation5 + $0x110] sm:$0xff] %v950
  %953 = vst [vmem:[#allocation5 + $0x118] sm:$0xff] %v951
  %v954 = vld [vmem:[%s3] sm:$0xff]
  %v955 = vld [vmem:[#allocation5] sm:$0xff]
  %v956 = vld [vmem:[#allocation5 + $0x8] sm:$0xff]
  %v957 = vld [vmem:[#allocation5 + $0x10] sm:$0xff]
  %v958 = vld [vmem:[#allocation5 + $0x18] sm:$0xff]
  %v959 = vld [vmem:[#allocation5 + $0x20] sm:$0xff]
  %v960 = vld [vmem:[#allocation5 + $0x28] sm:$0xff]
  %v961 = vld [vmem:[#allocation5 + $0x30] sm:$0xff]
  %v962 = vld [vmem:[#allocation5 + $0x38] sm:$0xff]
  %v963 = vld [vmem:[#allocation5 + $0x40] sm:$0xff]
  %v964 = vld [vmem:[#allocation5 + $0x48] sm:$0xff]
  %v965 = vld [vmem:[#allocation5 + $0x50] sm:$0xff]
  %v966 = vld [vmem:[#allocation5 + $0x58] sm:$0xff]
  %v967 = vld [vmem:[#allocation5 + $0x60] sm:$0xff]
  %v968 = vld [vmem:[#allocation5 + $0x68] sm:$0xff]
  %v969 = vld [vmem:[#allocation5 + $0x70] sm:$0xff]
  %v970 = vld [vmem:[#allocation5 + $0x78] sm:$0xff]
  %v971 = vld [vmem:[#allocation5 + $0x80] sm:$0xff]
  %v972 = vld [vmem:[#allocation5 + $0x88] sm:$0xff]
  %v973 = vld [vmem:[#allocation5 + $0x90] sm:$0xff]
  %v974 = vld [vmem:[#allocation5 + $0x98] sm:$0xff]
  %v975 = vld [vmem:[#allocation5 + $0xa0] sm:$0xff]
  %v976 = vld [vmem:[#allocation5 + $0xa8] sm:$0xff]
  %v977 = vld [vmem:[#allocation5 + $0xb0] sm:$0xff]
  %v978 = vld [vmem:[#allocation5 + $0xb8] sm:$0xff]
  %v979 = vld [vmem:[#allocation5 + $0xc0] sm:$0xff]
  %v980 = vld [vmem:[#allocation5 + $0xc8] sm:$0xff]
  %v981 = vld [vmem:[#allocation5 + $0xd0] sm:$0xff]
  %v982 = vld [vmem:[#allocation5 + $0xd8] sm:$0xff]
  %v983 = vld [vmem:[#allocation5 + $0xe0] sm:$0xff]
  %v984 = vld [vmem:[#allocation5 + $0xe8] sm:$0xff]
  %v985 = vld [vmem:[#allocation5 + $0xf0] sm:$0xff]
  %v986 = vld [vmem:[#allocation5 + $0xf8] sm:$0xff]
  %v987 = vld [vmem:[#allocation5 + $0x100] sm:$0xff]
  %v988 = vld [vmem:[#allocation5 + $0x108] sm:$0xff]
  %v989 = vld [vmem:[#allocation5 + $0x110] sm:$0xff]
  %v990 = vld [vmem:[#allocation5 + $0x118] sm:$0xff]
  %v991 = vld [vmem:[%s4] sm:$0xff]
  %993 = vset.pattern.permute.xlu0 0
  %994 = vperm.xlu0 %993, %v991
  %v995 = vpop.permute.xlu0 %994
  %vm997 = vcmask 588800
  %v999 = vsel %vm997, %v954, 0
  %1001 = vmatpush.msra.mxu0 0.0
  %1002 = vmatpush.msra.mxu0 0.0
  %1003 = vmatpush.msra.mxu0 0.0
  %1004 = vmatpush.msra.mxu0 0.0
  %1005 = vmatpush.msra.mxu0 0.0
  %1006 = vmatpush.msra.mxu0 0.0
  %1007 = vmatpush.msra.mxu0 0.0
  %1008 = vmatpush.msra.mxu0 %v987
  %1009 = vmatpush.msra.mxu0 %v983
  %1010 = vmatpush.msra.mxu0 %v979
  %1011 = vmatpush.msra.mxu0 %v975
  %1012 = vmatpush.msra.mxu0 %v971
  %1013 = vmatpush.msra.mxu0 %v967
  %1014 = vmatpush.msra.mxu0 %v963
  %1015 = vmatpush.msra.mxu0 %v959
  %1016 = vmatpush.msra.mxu0 %v955
  %1017 = vmatmul.f32.gmra.mxu0 %v999
  %v1018 = vpop.f32.mrf.mxu0
  %v1019 = vadd.f32 %v995, %v1018
  %1020 = vdwg.mxu0
  %1021 = vmatpush.msra.mxu0 0.0
  %1022 = vmatpush.msra.mxu0 0.0
  %1023 = vmatpush.msra.mxu0 0.0
  %1024 = vmatpush.msra.mxu0 0.0
  %1025 = vmatpush.msra.mxu0 0.0
  %1026 = vmatpush.msra.mxu0 0.0
  %1027 = vmatpush.msra.mxu0 0.0
  %1028 = vmatpush.msra.mxu0 %v988
  %1029 = vmatpush.msra.mxu0 %v984
  %1030 = vmatpush.msra.mxu0 %v980
  %1031 = vmatpush.msra.mxu0 %v976
  %1032 = vmatpush.msra.mxu0 %v972
  %1033 = vmatpush.msra.mxu0 %v968
  %1034 = vmatpush.msra.mxu0 %v964
  %1035 = vmatpush.msra.mxu0 %v960
  %1036 = vmatpush.msra.mxu0 %v956
  %1037 = vmatmul.f32.gmra.mxu0 %v999
  %v1038 = vpop.f32.mrf.mxu0
  %v1039 = vadd.f32 %v995, %v1038
  %1040 = vdwg.mxu0
  %1041 = vmatpush.msra.mxu0 0.0
  %1042 = vmatpush.msra.mxu0 0.0
  %1043 = vmatpush.msra.mxu0 0.0
  %1044 = vmatpush.msra.mxu0 0.0
  %1045 = vmatpush.msra.mxu0 0.0
  %1046 = vmatpush.msra.mxu0 0.0
  %1047 = vmatpush.msra.mxu0 0.0
  %1048 = vmatpush.msra.mxu0 %v989
  %1049 = vmatpush.msra.mxu0 %v985
  %1050 = vmatpush.msra.mxu0 %v981
  %1051 = vmatpush.msra.mxu0 %v977
  %1052 = vmatpush.msra.mxu0 %v973
  %1053 = vmatpush.msra.mxu0 %v969
  %1054 = vmatpush.msra.mxu0 %v965
  %1055 = vmatpush.msra.mxu0 %v961
  %1056 = vmatpush.msra.mxu0 %v957
  %1057 = vmatmul.f32.gmra.mxu0 %v999
  %v1058 = vpop.f32.mrf.mxu0
  %v1059 = vadd.f32 %v995, %v1058
  %1060 = vdwg.mxu0
  %1061 = vmatpush.msra.mxu0 0.0
  %1062 = vmatpush.msra.mxu0 0.0
  %1063 = vmatpush.msra.mxu0 0.0
  %1064 = vmatpush.msra.mxu0 0.0
  %1065 = vmatpush.msra.mxu0 0.0
  %1066 = vmatpush.msra.mxu0 0.0
  %1067 = vmatpush.msra.mxu0 0.0
  %1068 = vmatpush.msra.mxu0 %v990
  %1069 = vmatpush.msra.mxu0 %v986
  %1070 = vmatpush.msra.mxu0 %v982
  %1071 = vmatpush.msra.mxu0 %v978
  %1072 = vmatpush.msra.mxu0 %v974
  %1073 = vmatpush.msra.mxu0 %v970
  %1074 = vmatpush.msra.mxu0 %v966
  %1075 = vmatpush.msra.mxu0 %v962
  %1076 = vmatpush.msra.mxu0 %v958
  %1077 = vmatmul.f32.gmra.mxu0 %v999
  %v1078 = vpop.f32.mrf.mxu0
  %v1079 = vadd.f32 %v995, %v1078
  %1080 = vdwg.mxu0
  %v1081 = vmax.f32 %v1019, 0.0
  %v1082 = vmax.f32 %v1039, 0.0
  %v1083 = vmax.f32 %v1059, 0.0
  %v1084 = vmax.f32 %v1079, 0.0
  %1085 = vst [vmem:[%s5] sm:$0xff] %v1081
  %1086 = vst [vmem:[%s5 + $0x8] sm:$0xff] %v1082
  %s1087 = scalar_lea.vmem %s5, 16
  %1088 = vst [vmem:[%s1087] sm:$0xff] %v1083
  %1089 = vst [vmem:[%s1087 + $0x8] sm:$0xff] %v1084
  // Predicated region
  $region26: #{conv_block.1} parent=0 // pred_check
    _
  $region27: #{conv_block.1} parent=0 // pred_check_branch
    %1091 = sbr.rel (0) target = $region29
  $region28: #{conv_block.1} parent=0 // pred_region
    _
  $region29: #{conv_block.1} parent=0 // pred_fallthru
    _
  // Predicated region
  $region30: #{conv_block.1} parent=0 // pred_check
    _
  $region31: #{conv_block.1} parent=0 // pred_check_branch
    %1093 = sbr.rel (0) target = $region33
  $region32: #{conv_block.1} parent=0 // pred_region
    _
  $region33: #{conv_block.1} parent=0 // pred_fallthru
    _

</llo_original>
